<compile_context>
chip_gen: v7x
topology: tpu7x:2x2x1
jax: 0.10.0
libtpu: 0.0.40
codegen_flags: <defaults>
</compile_context>

<pallas_src>
import functools

import jax
import jax.numpy as jnp
from jax import lax
from jax.experimental import pallas as pl
from jax.experimental.pallas import tpu as pltpu

D_IN = 32    # input_dim
H    = 256   # hidden width
Z    = 2     # bottleneck width


def _cdiv(a, b):
    return -(-a // b)


def _lane_pack(d):
    """How many batch rows share one 128-lane register row."""
    return 128 // d if (d <= 128 and 128 % d == 0) else 1


def autoencoder_kernel(x_ref,
                       w1_ref, b1_ref,
                       w2_ref, b2_ref,
                       w3_ref, b3_ref,
                       w4_ref, b4_ref,
                       o_ref,
                       *, chunk, n_chunks):
    # x_ref: (TR, pack*D) f32.  Weights are bf16 block-diagonal, biases f32 (tiled).
    w1, w2, w3, w4 = w1_ref[...], w2_ref[...], w3_ref[...], w4_ref[...]
    b1, b2, b3, b4 = b1_ref[...], b2_ref[...], b3_ref[...], b4_ref[...]

    def layers(xc):
        xb = xc.astype(jnp.bfloat16)
        # encoder: Linear(D,256) -> ReLU -> Linear(256,2)
        h1 = jnp.dot(xb, w1, preferred_element_type=jnp.float32) + b1
        h1 = jnp.maximum(h1, 0.0).astype(jnp.bfloat16)
        z = jnp.dot(h1, w2, preferred_element_type=jnp.float32) + b2
        # decoder: ReLU -> Linear(2,256) -> ReLU -> Linear(256,D)
        z = jnp.maximum(z, 0.0).astype(jnp.bfloat16)
        h2 = jnp.dot(z, w3, preferred_element_type=jnp.float32) + b3
        h2 = jnp.maximum(h2, 0.0).astype(jnp.bfloat16)
        return jnp.dot(h2, w4, preferred_element_type=jnp.float32) + b4

    if n_chunks == 1:
        o_ref[...] = layers(x_ref[...]).astype(o_ref.dtype)
    else:
        # Row-chunked: keeps intermediates small and lets the LLO scheduler overlap
        # layer-4 MXU pushes of chunk i with layer-1 pushes of chunk i+1.
        def body(c, carry):
            r0 = pl.multiple_of(c * chunk, chunk)
            y = layers(x_ref[pl.ds(r0, chunk), :])
            o_ref[pl.ds(r0, chunk), :] = y.astype(o_ref.dtype)
            return carry

        lax.fori_loop(0, n_chunks, body, 0, unroll=n_chunks <= 8)


def pack_params(params):
    """Expand (in,out) weights to bf16 block-diag copies; tile (1,out) biases (f32).

    Run ONCE per parameter set (hoisted out of the forward path)."""
    D = params["w1"].shape[0]
    pack = _lane_pack(D)
    eye = jnp.eye(pack, dtype=jnp.float32)

    def w(name):
        return jnp.kron(eye, params[name]).astype(jnp.bfloat16)

    def b(name):
        return jnp.tile(params[name], (1, pack)).astype(jnp.float32)

    return (w("w1"), b("b1"), w("w2"), b("b2"),
            w("w3"), b("b3"), w("w4"), b("b4"))


def autoencoder_forward(x, packed, *, tb=None):
    """x: (B, D) f32.  packed: output of pack_params (pre-expanded bf16 weights)."""
    B, D = x.shape
    pack = _lane_pack(D)
    Dp = D * pack
    assert packed[0].shape == (Dp, pack * H)

    # --- batch tile selection (rows of the ORIGINAL batch per grid step) ---
    step = 8 * pack                      # minimum tile: keeps packed tiles (8,128)-aligned
    if tb is None:
        tb = 8192                        # large default; chunking bounds VMEM use
    tb = max(step, (tb // step) * step)

    if B >= 2 * step:
        # Always produce an EVEN grid-step count >= 2 so the "parallel" grid axis
        # can be sharded across v7x's two TensorCores.
        n = max(2, _cdiv(B, tb))
        if n % 2:
            n += 1
        tb = _cdiv(_cdiv(B, n), step) * step
        n = _cdiv(B, tb)
        if n > 1 and n % 2:
            n += 1                       # pad one extra (cheap) tile to keep it even
        Bp = n * tb
    else:
        # Tiny batch: single tile, pad only to the packing factor.
        Bp = _cdiv(B, pack) * pack
        tb = Bp
        n = 1

    if Bp != B:
        x = jnp.pad(x, ((0, Bp - B), (0, 0)))   # zero rows, sliced off at the end

    R, TR = Bp // pack, tb // pack              # packed rows: total / per tile
    assert n * TR == R
    assert n == 1 or TR % 8 == 0

    # In-kernel row chunk: <= 256 packed rows, must divide TR exactly.
    chunk = TR
    for cand in (256, 128, 64, 32, 16, 8):
        if TR >= cand and TR % cand == 0:
            chunk = cand
            break
    n_chunks = TR // chunk

    xp = x.reshape(R, Dp)                       # free, contiguous reshape

    full = lambda a: pl.BlockSpec(a.shape, lambda i: (0, 0))   # VMEM-resident constants
    in_specs = [pl.BlockSpec((TR, Dp), lambda i: (i, 0))] + [full(a) for a in packed]

    flops = 2 * Bp * (D * H + H * Z + Z * H + H * D)
    bytes_accessed = 2 * Bp * D * 4 + sum(int(a.size) * a.dtype.itemsize for a in packed)

    out = pl.pallas_call(
        functools.partial(autoencoder_kernel, chunk=chunk, n_chunks=n_chunks),
        out_shape=jax.ShapeDtypeStruct((R, Dp), x.dtype),
        grid_spec=pltpu.PrefetchScalarGridSpec(
            num_scalar_prefetch=0,
            grid=(n,),
            in_specs=in_specs,
            out_specs=pl.BlockSpec((TR, Dp), lambda i: (i, 0)),
        ),
        compiler_params=pltpu.CompilerParams(
            dimension_semantics=("parallel",),
            vmem_limit_bytes=32 * 1024 * 1024,
        ),
        cost_estimate=pl.CostEstimate(
            flops=flops, transcendentals=0, bytes_accessed=bytes_accessed),
    )(xp, *packed)

    return out.reshape(Bp, D)[:B]


def init_params(key, input_dim):
    """Deterministic synthetic init. Weights stored transposed (in, out)."""
    ks = jax.random.split(key, 8)

    def lin(kw, kb, fan_in, fan_out):
        bound = 1.0 / jnp.sqrt(fan_in)
        w = jax.random.uniform(kw, (fan_in, fan_out), jnp.float32, -bound, bound)
        b = jax.random.uniform(kb, (1, fan_out), jnp.float32, -bound, bound)
        return w, b

    w1, b1 = lin(ks[0], ks[1], input_dim, H)
    w2, b2 = lin(ks[2], ks[3], H, Z)
    w3, b3 = lin(ks[4], ks[5], Z, H)
    w4, b4 = lin(ks[6], ks[7], H, input_dim)
    return dict(w1=w1, b1=b1, w2=w2, b2=b2, w3=w3, b3=b3, w4=w4, b4=b4)


def reference_forward(x, p):
    h1 = jnp.maximum(x @ p["w1"] + p["b1"], 0.0)
    z = h1 @ p["w2"] + p["b2"]
    z = jnp.maximum(z, 0.0)
    h2 = jnp.maximum(z @ p["w3"] + p["b3"], 0.0)
    return h2 @ p["w4"] + p["b4"]


if __name__ == "__main__":
    key = jax.random.PRNGKey(0)
    kx, kp = jax.random.split(key)

    params = init_params(kp, D_IN)
    packed = pack_params(params)          # kron expansion hoisted out of the call path

    fwd = jax.jit(autoencoder_forward, static_argnames=("tb",))

    # Small batch: single-tile path (block == full array).
    B = 8
    x = jax.random.normal(kx, (B, D_IN), jnp.float32)
    out = jax.block_until_ready(fwd(x, packed))
    ref = reference_forward(x, params)
    assert out.shape == (B, D_IN)
    # bf16 matmuls with f32 accumulation -> relaxed tolerance vs the f32 reference.
    assert jnp.allclose(out, ref, atol=2e-2, rtol=2e-2), "mismatch (small batch)"

    # Multi-tile path: even grid-step count (v7x 2-TC sharding) + batch padding.
    B2 = 200
    x2 = jax.random.normal(jax.random.fold_in(kx, 1), (B2, D_IN), jnp.float32)
    out2 = jax.block_until_ready(fwd(x2, packed))
    ref2 = reference_forward(x2, params)
    assert out2.shape == (B2, D_IN)
    assert jnp.allclose(out2, ref2, atol=2e-2, rtol=2e-2), "mismatch (tiled batch)"

    print("KERNEL_OK")
</pallas_src>

<mosaic_0001>
module attributes {stable_mosaic.version = 11 : i64} {
  func.func @autoencoder_kernel(%arg0: i32, %arg1: memref<2x128xf32, #tpu.memory_space<vmem>>, %arg2: memref<128x1024xbf16, #tpu.memory_space<vmem>>, %arg3: memref<1x1024xf32, #tpu.memory_space<vmem>>, %arg4: memref<1024x8xbf16, #tpu.memory_space<vmem>>, %arg5: memref<1x8xf32, #tpu.memory_space<vmem>>, %arg6: memref<8x1024xbf16, #tpu.memory_space<vmem>>, %arg7: memref<1x1024xf32, #tpu.memory_space<vmem>>, %arg8: memref<1024x128xbf16, #tpu.memory_space<vmem>>, %arg9: memref<1x128xf32, #tpu.memory_space<vmem>>, %arg10: memref<2x128xf32, #tpu.memory_space<vmem>>) attributes {dimension_semantics = [#tpu.dimension_semantics<parallel>], iteration_bounds = array<i64: 1>, scalar_prefetch = 0 : i64, scratch_operands = 0 : i64, tpu.core_type = #tpu.core_type<tc>, window_params = [{transform_indices = @transform_0, window_bounds = array<i64: 2, 128>}, {pipeline_mode = #tpu.pipeline_mode<synchronous>, transform_indices = @transform_1, window_bounds = array<i64: 128, 1024>}, {pipeline_mode = #tpu.pipeline_mode<synchronous>, transform_indices = @transform_2, window_bounds = array<i64: 1, 1024>}, {pipeline_mode = #tpu.pipeline_mode<synchronous>, transform_indices = @transform_3, window_bounds = array<i64: 1024, 8>}, {pipeline_mode = #tpu.pipeline_mode<synchronous>, transform_indices = @transform_4, window_bounds = array<i64: 1, 8>}, {pipeline_mode = #tpu.pipeline_mode<synchronous>, transform_indices = @transform_5, window_bounds = array<i64: 8, 1024>}, {pipeline_mode = #tpu.pipeline_mode<synchronous>, transform_indices = @transform_6, window_bounds = array<i64: 1, 1024>}, {pipeline_mode = #tpu.pipeline_mode<synchronous>, transform_indices = @transform_7, window_bounds = array<i64: 1024, 128>}, {pipeline_mode = #tpu.pipeline_mode<synchronous>, transform_indices = @transform_8, window_bounds = array<i64: 1, 128>}, {transform_indices = @transform_9, window_bounds = array<i64: 2, 128>}]} {
    %c0 = arith.constant 0 : index
    %c0_0 = arith.constant 0 : index
    %0 = vector.load %arg2[%c0, %c0_0] : memref<128x1024xbf16, #tpu.memory_space<vmem>>, vector<128x1024xbf16>
    %c0_1 = arith.constant 0 : index
    %c0_2 = arith.constant 0 : index
    %1 = vector.load %arg4[%c0_1, %c0_2] : memref<1024x8xbf16, #tpu.memory_space<vmem>>, vector<1024x8xbf16>
    %c0_3 = arith.constant 0 : index
    %c0_4 = arith.constant 0 : index
    %2 = vector.load %arg6[%c0_3, %c0_4] : memref<8x1024xbf16, #tpu.memory_space<vmem>>, vector<8x1024xbf16>
    %c0_5 = arith.constant 0 : index
    %c0_6 = arith.constant 0 : index
    %3 = vector.load %arg8[%c0_5, %c0_6] : memref<1024x128xbf16, #tpu.memory_space<vmem>>, vector<1024x128xbf16>
    %c0_7 = arith.constant 0 : index
    %c0_8 = arith.constant 0 : index
    %4 = vector.load %arg3[%c0_7, %c0_8] : memref<1x1024xf32, #tpu.memory_space<vmem>>, vector<1x1024xf32>
    %c0_9 = arith.constant 0 : index
    %c0_10 = arith.constant 0 : index
    %5 = vector.load %arg5[%c0_9, %c0_10] : memref<1x8xf32, #tpu.memory_space<vmem>>, vector<1x8xf32>
    %c0_11 = arith.constant 0 : index
    %c0_12 = arith.constant 0 : index
    %6 = vector.load %arg7[%c0_11, %c0_12] : memref<1x1024xf32, #tpu.memory_space<vmem>>, vector<1x1024xf32>
    %c0_13 = arith.constant 0 : index
    %c0_14 = arith.constant 0 : index
    %7 = vector.load %arg9[%c0_13, %c0_14] : memref<1x128xf32, #tpu.memory_space<vmem>>, vector<1x128xf32>
    %c0_15 = arith.constant 0 : index
    %c0_16 = arith.constant 0 : index
    %8 = vector.load %arg1[%c0_15, %c0_16] : memref<2x128xf32, #tpu.memory_space<vmem>>, vector<2x128xf32>
    %9 = arith.truncf %8 : vector<2x128xf32> to vector<2x128xbf16>
    %cst = arith.constant dense<0.000000e+00> : vector<2x1024xf32>
    %10 = tpu.matmul %9, %0, %cst {dimension_numbers = #tpu.dot_dimension_numbers<[1], [0], [0], [1], [0, 0, 1, 1], [], []>} : vector<2x128xbf16>, vector<128x1024xbf16>, vector<2x1024xf32> -> vector<2x1024xf32>
    %11 = vector.broadcast %4 : vector<1x1024xf32> to vector<2x1024xf32>
    %12 = arith.addf %10, %11 : vector<2x1024xf32>
    %cst_17 = arith.constant 0.000000e+00 : f32
    %13 = vector.broadcast %cst_17 : f32 to vector<2x1024xf32>
    %14 = arith.maximumf %12, %13 : vector<2x1024xf32>
    %15 = arith.truncf %14 : vector<2x1024xf32> to vector<2x1024xbf16>
    %cst_18 = arith.constant dense<0.000000e+00> : vector<2x8xf32>
    %16 = tpu.matmul %15, %1, %cst_18 {dimension_numbers = #tpu.dot_dimension_numbers<[1], [0], [0], [1], [0, 0, 1, 1], [], []>} : vector<2x1024xbf16>, vector<1024x8xbf16>, vector<2x8xf32> -> vector<2x8xf32>
    %17 = vector.broadcast %5 : vector<1x8xf32> to vector<2x8xf32>
    %18 = arith.addf %16, %17 : vector<2x8xf32>
    %cst_19 = arith.constant 0.000000e+00 : f32
    %19 = vector.broadcast %cst_19 : f32 to vector<2x8xf32>
    %20 = arith.maximumf %18, %19 : vector<2x8xf32>
    %21 = arith.truncf %20 : vector<2x8xf32> to vector<2x8xbf16>
    %cst_20 = arith.constant dense<0.000000e+00> : vector<2x1024xf32>
    %22 = tpu.matmul %21, %2, %cst_20 {dimension_numbers = #tpu.dot_dimension_numbers<[1], [0], [0], [1], [0, 0, 1, 1], [], []>} : vector<2x8xbf16>, vector<8x1024xbf16>, vector<2x1024xf32> -> vector<2x1024xf32>
    %23 = vector.broadcast %6 : vector<1x1024xf32> to vector<2x1024xf32>
    %24 = arith.addf %22, %23 : vector<2x1024xf32>
    %cst_21 = arith.constant 0.000000e+00 : f32
    %25 = vector.broadcast %cst_21 : f32 to vector<2x1024xf32>
    %26 = arith.maximumf %24, %25 : vector<2x1024xf32>
    %27 = arith.truncf %26 : vector<2x1024xf32> to vector<2x1024xbf16>
    %cst_22 = arith.constant dense<0.000000e+00> : vector<2x128xf32>
    %28 = tpu.matmul %27, %3, %cst_22 {dimension_numbers = #tpu.dot_dimension_numbers<[1], [0], [0], [1], [0, 0, 1, 1], [], []>} : vector<2x1024xbf16>, vector<1024x128xbf16>, vector<2x128xf32> -> vector<2x128xf32>
    %29 = vector.broadcast %7 : vector<1x128xf32> to vector<2x128xf32>
    %30 = arith.addf %28, %29 : vector<2x128xf32>
    %c0_23 = arith.constant 0 : index
    %c0_24 = arith.constant 0 : index
    %31 = vector.load %arg10[%c0_23, %c0_24] : memref<2x128xf32, #tpu.memory_space<vmem>>, vector<2x128xf32>
    tpu.vector_store %arg10[%c0_23, %c0_24], %30 {strides = array<i32>} : memref<2x128xf32, #tpu.memory_space<vmem>>, vector<2x128xf32>,
    return
  }
  func.func @transform_0(%arg0: i32) -> (i32, i32) {
    %c0_i32 = arith.constant 0 : i32
    %c0_i32_0 = arith.constant 0 : i32
    return %arg0, %c0_i32 : i32, i32
  }
  func.func @transform_1(%arg0: i32) -> (i32, i32) {
    %c0_i32 = arith.constant 0 : i32
    %c0_i32_0 = arith.constant 0 : i32
    %c0_i32_1 = arith.constant 0 : i32
    return %c0_i32, %c0_i32_0 : i32, i32
  }
  func.func @transform_2(%arg0: i32) -> (i32, i32) {
    %c0_i32 = arith.constant 0 : i32
    %c0_i32_0 = arith.constant 0 : i32
    %c0_i32_1 = arith.constant 0 : i32
    return %c0_i32, %c0_i32_0 : i32, i32
  }
  func.func @transform_3(%arg0: i32) -> (i32, i32) {
    %c0_i32 = arith.constant 0 : i32
    %c0_i32_0 = arith.constant 0 : i32
    %c0_i32_1 = arith.constant 0 : i32
    return %c0_i32, %c0_i32_0 : i32, i32
  }
  func.func @transform_4(%arg0: i32) -> (i32, i32) {
    %c0_i32 = arith.constant 0 : i32
    %c0_i32_0 = arith.constant 0 : i32
    %c0_i32_1 = arith.constant 0 : i32
    return %c0_i32, %c0_i32_0 : i32, i32
  }
  func.func @transform_5(%arg0: i32) -> (i32, i32) {
    %c0_i32 = arith.constant 0 : i32
    %c0_i32_0 = arith.constant 0 : i32
    %c0_i32_1 = arith.constant 0 : i32
    return %c0_i32, %c0_i32_0 : i32, i32
  }
  func.func @transform_6(%arg0: i32) -> (i32, i32) {
    %c0_i32 = arith.constant 0 : i32
    %c0_i32_0 = arith.constant 0 : i32
    %c0_i32_1 = arith.constant 0 : i32
    return %c0_i32, %c0_i32_0 : i32, i32
  }
  func.func @transform_7(%arg0: i32) -> (i32, i32) {
    %c0_i32 = arith.constant 0 : i32
    %c0_i32_0 = arith.constant 0 : i32
    %c0_i32_1 = arith.constant 0 : i32
    return %c0_i32, %c0_i32_0 : i32, i32
  }
  func.func @transform_8(%arg0: i32) -> (i32, i32) {
    %c0_i32 = arith.constant 0 : i32
    %c0_i32_0 = arith.constant 0 : i32
    %c0_i32_1 = arith.constant 0 : i32
    return %c0_i32, %c0_i32_0 : i32, i32
  }
  func.func @transform_9(%arg0: i32) -> (i32, i32) {
    %c0_i32 = arith.constant 0 : i32
    %c0_i32_0 = arith.constant 0 : i32
    return %arg0, %c0_i32 : i32, i32
  }
}

</mosaic_0001>

<llo_original>
// kernel: autoencoder_forward.1
$region0: #{autoencoder_forward.1}
  #allocation0 [shape = 'u32[]', space=smem, size = 0x4, offset = 0x4, fixed_abs, tag = 'smem constant byte address 0x4 - core index']
  #allocation1 [shape = 'u32[144,128]{1,0:T(1,128)}', space=vmem, size = 0x12000, scoped, tag = 'internal scratch']
  %s0 = inlined_call_operand.vmem [shape: f32[2,128], index: 0, kind: input, shape index: {}]
  %s1 = inlined_call_operand.vmem [shape: bf16[128,1024], index: 1, kind: input, shape index: {}]
  %s2 = inlined_call_operand.vmem [shape: f32[1,1024], index: 2, kind: input, shape index: {}]
  %s3 = inlined_call_operand.vmem [shape: bf16[1024,8], index: 3, kind: input, shape index: {}]
  %s4 = inlined_call_operand.vmem [shape: f32[1,8], index: 4, kind: input, shape index: {}]
  %s5 = inlined_call_operand.vmem [shape: bf16[8,1024], index: 5, kind: input, shape index: {}]
  %s6 = inlined_call_operand.vmem [shape: f32[1,1024], index: 6, kind: input, shape index: {}]
  %s7 = inlined_call_operand.hbm [shape: bf16[1024,128], index: 7, kind: input, shape index: {}]
  %s8 = inlined_call_operand.vmem [shape: f32[1,128], index: 8, kind: input, shape index: {}]
  %s9 = inlined_call_operand.vmem [shape: f32[2,128], index: 9, kind: output, shape index: {}]
  %s10 = sld [smem:[#allocation0]]
  $region50: #{autoencoder_forward.1} parent=0
    _
  %s12 = ssub.s32 1, %s10
  %s13 = scalar_select 0, %s12, %s10
  $region1: #{autoencoder_forward.1} parent=0
    #allocation2 [shape = 'u8[262144]{0}', space=vmem, size = 0x40000, scoped, tag = 'input window, operand 7, single buffered']
    #allocation3 [shape = 's32[1]{0}', space=sflag, size = 0x4, scoped, tag = 'scoped memory for autoencoder_forward.1']
    %14 = vsyncpa [#allocation3], 0
    // Predicated region
    $region2: #{autoencoder_forward.1} parent=1 // pred_check
      _
    $region3: #{autoencoder_forward.1} parent=1 // pred_check_branch
      %16 = sbr.rel (0) target = $region5
    $region4: #{autoencoder_forward.1} parent=1 // pred_region
      _
    $region5: #{autoencoder_forward.1} parent=1 // pred_fallthru
      _
    // Predicated region
    $region6: #{autoencoder_forward.1} parent=1 // pred_check
      _
    $region7: #{autoencoder_forward.1} parent=1 // pred_check_branch
      %18 = sbr.rel (0) target = $region9
    $region8: #{autoencoder_forward.1} parent=1 // pred_region
      _
    $region9: #{autoencoder_forward.1} parent=1 // pred_fallthru
      _
    // Predicated region
    $region10: #{autoencoder_forward.1} parent=1 // pred_check
      _
    $region11: #{autoencoder_forward.1} parent=1 // pred_check_branch
      %20 = sbr.rel (0) target = $region13
    $region12: #{autoencoder_forward.1} parent=1 // pred_region
      _
    $region13: #{autoencoder_forward.1} parent=1 // pred_fallthru
      _
    // Predicated region
    $region14: #{autoencoder_forward.1} parent=1 // pred_check
      _
    $region15: #{autoencoder_forward.1} parent=1 // pred_check_branch
      %22 = sbr.rel (0) target = $region17
    $region16: #{autoencoder_forward.1} parent=1 // pred_region
      _
    $region17: #{autoencoder_forward.1} parent=1 // pred_fallthru
      _
    // Predicated region
    $region18: #{autoencoder_forward.1} parent=1 // pred_check
      _
    $region19: #{autoencoder_forward.1} parent=1 // pred_check_branch
      %24 = sbr.rel (0) target = $region21
    $region20: #{autoencoder_forward.1} parent=1 // pred_region
      _
    $region21: #{autoencoder_forward.1} parent=1 // pred_fallthru
      _
    // Predicated region
    $region22: #{autoencoder_forward.1} parent=1 // pred_check
      _
    $region23: #{autoencoder_forward.1} parent=1 // pred_check_branch
      %26 = sbr.rel (0) target = $region25
    $region24: #{autoencoder_forward.1} parent=1 // pred_region
      _
    $region25: #{autoencoder_forward.1} parent=1 // pred_fallthru
      _
    // Predicated region
    $region26: #{autoencoder_forward.1} parent=1 // pred_check
      _
    $region27: #{autoencoder_forward.1} parent=1 // pred_check_branch
      %28 = sbr.rel (0) target = $region29
    $region28: #{autoencoder_forward.1} parent=1 // pred_region
      _
    $region29: #{autoencoder_forward.1} parent=1 // pred_fallthru
      _
    // Predicated region
    $region30: #{autoencoder_forward.1} parent=1 // pred_check
      _
    $region31: #{autoencoder_forward.1} parent=1 // pred_check_branch
      %30 = sbr.rel (0) target = $region33
    $region32: #{autoencoder_forward.1} parent=1 // pred_region
      %s32 = ssub.s32 8192, 8192
      %33 = vsyncadd [#allocation3], %s32
      %s34 = sshll.u32 [#allocation2], 4
      %s35 = int_to_ptr.vmem [resolvable:$true] %s34
      %40 = dma.hbm_to_vmem [thread:$0]  %s7, 8192, %s35, [#allocation3], 64, 64, 4
    $region33: #{autoencoder_forward.1} parent=1 // pred_fallthru
      _
    // Predicated region
    $region34: #{autoencoder_forward.1} parent=1 // pred_check
      _
    $region35: #{autoencoder_forward.1} parent=1 // pred_check_branch
      %42 = sbr.rel (0) target = $region37
    $region36: #{autoencoder_forward.1} parent=1 // pred_region
      _
    $region37: #{autoencoder_forward.1} parent=1 // pred_fallthru
      _
    // Predicated region
    $region38: #{autoencoder_forward.1} parent=1 // pred_check
      _
    $region39: #{autoencoder_forward.1} parent=1 // pred_check_branch
      %44 = sbr.rel (0) target = $region41
    $region40: #{autoencoder_forward.1} parent=1 // pred_region
      %45 = dma.done [#allocation3], 8192
    $region41: #{autoencoder_forward.1} parent=1 // pred_fallthru
      _
    %v47 = vld [vmem:[%s1] sm:$0xff]
    %v48 = vld [vmem:[%s1 + $0x8] sm:$0xff]
    %v49 = vld [vmem:[%s1 + $0x10] sm:$0xff]
    %v50 = vld [vmem:[%s1 + $0x18] sm:$0xff]
    %v51 = vld [vmem:[%s1 + $0x20] sm:$0xff]
    %v52 = vld [vmem:[%s1 + $0x28] sm:$0xff]
    %v53 = vld [vmem:[%s1 + $0x30] sm:$0xff]
    %v54 = vld [vmem:[%s1 + $0x38] sm:$0xff]
    %v55 = vld [vmem:[%s1 + $0x40] sm:$0xff]
    %v56 = vld [vmem:[%s1 + $0x48] sm:$0xff]
    %v57 = vld [vmem:[%s1 + $0x50] sm:$0xff]
    %v58 = vld [vmem:[%s1 + $0x58] sm:$0xff]
    %v59 = vld [vmem:[%s1 + $0x60] sm:$0xff]
    %v60 = vld [vmem:[%s1 + $0x68] sm:$0xff]
    %v61 = vld [vmem:[%s1 + $0x70] sm:$0xff]
    %v62 = vld [vmem:[%s1 + $0x78] sm:$0xff]
    %v63 = vld [vmem:[%s1 + $0x80] sm:$0xff]
    %v64 = vld [vmem:[%s1 + $0x88] sm:$0xff]
    %v65 = vld [vmem:[%s1 + $0x90] sm:$0xff]
    %v66 = vld [vmem:[%s1 + $0x98] sm:$0xff]
    %v67 = vld [vmem:[%s1 + $0xa0] sm:$0xff]
    %v68 = vld [vmem:[%s1 + $0xa8] sm:$0xff]
    %v69 = vld [vmem:[%s1 + $0xb0] sm:$0xff]
    %v70 = vld [vmem:[%s1 + $0xb8] sm:$0xff]
    %v71 = vld [vmem:[%s1 + $0xc0] sm:$0xff]
    %v72 = vld [vmem:[%s1 + $0xc8] sm:$0xff]
    %v73 = vld [vmem:[%s1 + $0xd0] sm:$0xff]
    %v74 = vld [vmem:[%s1 + $0xd8] sm:$0xff]
    %v75 = vld [vmem:[%s1 + $0xe0] sm:$0xff]
    %v76 = vld [vmem:[%s1 + $0xe8] sm:$0xff]
    %v77 = vld [vmem:[%s1 + $0xf0] sm:$0xff]
    %v78 = vld [vmem:[%s1 + $0xf8] sm:$0xff]
    %v79 = vld [vmem:[%s1 + $0x100] sm:$0xff]
    %v80 = vld [vmem:[%s1 + $0x108] sm:$0xff]
    %v81 = vld [vmem:[%s1 + $0x110] sm:$0xff]
    %v82 = vld [vmem:[%s1 + $0x118] sm:$0xff]
    %v83 = vld [vmem:[%s1 + $0x120] sm:$0xff]
    %v84 = vld [vmem:[%s1 + $0x128] sm:$0xff]
    %v85 = vld [vmem:[%s1 + $0x130] sm:$0xff]
    %v86 = vld [vmem:[%s1 + $0x138] sm:$0xff]
    %v87 = vld [vmem:[%s1 + $0x140] sm:$0xff]
    %v88 = vld [vmem:[%s1 + $0x148] sm:$0xff]
    %v89 = vld [vmem:[%s1 + $0x150] sm:$0xff]
    %v90 = vld [vmem:[%s1 + $0x158] sm:$0xff]
    %v91 = vld [vmem:[%s1 + $0x160] sm:$0xff]
    %v92 = vld [vmem:[%s1 + $0x168] sm:$0xff]
    %v93 = vld [vmem:[%s1 + $0x170] sm:$0xff]
    %v94 = vld [vmem:[%s1 + $0x178] sm:$0xff]
    %v95 = vld [vmem:[%s1 + $0x180] sm:$0xff]
    %v96 = vld [vmem:[%s1 + $0x188] sm:$0xff]
    %v97 = vld [vmem:[%s1 + $0x190] sm:$0xff]
    %v98 = vld [vmem:[%s1 + $0x198] sm:$0xff]
    %v99 = vld [vmem:[%s1 + $0x1a0] sm:$0xff]
    %v100 = vld [vmem:[%s1 + $0x1a8] sm:$0xff]
    %v101 = vld [vmem:[%s1 + $0x1b0] sm:$0xff]
    %v102 = vld [vmem:[%s1 + $0x1b8] sm:$0xff]
    %v103 = vld [vmem:[%s1 + $0x1c0] sm:$0xff]
    %v104 = vld [vmem:[%s1 + $0x1c8] sm:$0xff]
    %v105 = vld [vmem:[%s1 + $0x1d0] sm:$0xff]
    %v106 = vld [vmem:[%s1 + $0x1d8] sm:$0xff]
    %v107 = vld [vmem:[%s1 + $0x1e0] sm:$0xff]
    %v108 = vld [vmem:[%s1 + $0x1e8] sm:$0xff]
    %v109 = vld [vmem:[%s1 + $0x1f0] sm:$0xff]
    %v110 = vld [vmem:[%s1 + $0x1f8] sm:$0xff]
    %v111 = vld [vmem:[%s3] sm:$0xf]
    %v112 = vld [vmem:[%s3 + $0x4] sm:$0xf]
    %v113 = vld [vmem:[%s3 + $0x8] sm:$0xf]
    %v114 = vld [vmem:[%s3 + $0xc] sm:$0xf]
    %v115 = vld [vmem:[%s3 + $0x10] sm:$0xf]
    %v116 = vld [vmem:[%s3 + $0x14] sm:$0xf]
    %v117 = vld [vmem:[%s3 + $0x18] sm:$0xf]
    %v118 = vld [vmem:[%s3 + $0x1c] sm:$0xf]
    %v119 = vld [vmem:[%s3 + $0x20] sm:$0xf]
    %v120 = vld [vmem:[%s3 + $0x24] sm:$0xf]
    %v121 = vld [vmem:[%s3 + $0x28] sm:$0xf]
    %v122 = vld [vmem:[%s3 + $0x2c] sm:$0xf]
    %v123 = vld [vmem:[%s3 + $0x30] sm:$0xf]
    %v124 = vld [vmem:[%s3 + $0x34] sm:$0xf]
    %v125 = vld [vmem:[%s3 + $0x38] sm:$0xf]
    %v126 = vld [vmem:[%s3 + $0x3c] sm:$0xf]
    %v127 = vld [vmem:[%s3 + $0x40] sm:$0xf]
    %v128 = vld [vmem:[%s3 + $0x44] sm:$0xf]
    %v129 = vld [vmem:[%s3 + $0x48] sm:$0xf]
    %v130 = vld [vmem:[%s3 + $0x4c] sm:$0xf]
    %v131 = vld [vmem:[%s3 + $0x50] sm:$0xf]
    %v132 = vld [vmem:[%s3 + $0x54] sm:$0xf]
    %v133 = vld [vmem:[%s3 + $0x58] sm:$0xf]
    %v134 = vld [vmem:[%s3 + $0x5c] sm:$0xf]
    %v135 = vld [vmem:[%s3 + $0x60] sm:$0xf]
    %v136 = vld [vmem:[%s3 + $0x64] sm:$0xf]
    %v137 = vld [vmem:[%s3 + $0x68] sm:$0xf]
    %v138 = vld [vmem:[%s3 + $0x6c] sm:$0xf]
    %v139 = vld [vmem:[%s3 + $0x70] sm:$0xf]
    %v140 = vld [vmem:[%s3 + $0x74] sm:$0xf]
    %v141 = vld [vmem:[%s3 + $0x78] sm:$0xf]
    %v142 = vld [vmem:[%s3 + $0x7c] sm:$0xf]
    %v143 = vld [vmem:[%s3 + $0x80] sm:$0xf]
    %v144 = vld [vmem:[%s3 + $0x84] sm:$0xf]
    %v145 = vld [vmem:[%s3 + $0x88] sm:$0xf]
    %v146 = vld [vmem:[%s3 + $0x8c] sm:$0xf]
    %v147 = vld [vmem:[%s3 + $0x90] sm:$0xf]
    %v148 = vld [vmem:[%s3 + $0x94] sm:$0xf]
    %v149 = vld [vmem:[%s3 + $0x98] sm:$0xf]
    %v150 = vld [vmem:[%s3 + $0x9c] sm:$0xf]
    %v151 = vld [vmem:[%s3 + $0xa0] sm:$0xf]
    %v152 = vld [vmem:[%s3 + $0xa4] sm:$0xf]
    %v153 = vld [vmem:[%s3 + $0xa8] sm:$0xf]
    %v154 = vld [vmem:[%s3 + $0xac] sm:$0xf]
    %v155 = vld [vmem:[%s3 + $0xb0] sm:$0xf]
    %v156 = vld [vmem:[%s3 + $0xb4] sm:$0xf]
    %v157 = vld [vmem:[%s3 + $0xb8] sm:$0xf]
    %v158 = vld [vmem:[%s3 + $0xbc] sm:$0xf]
    %v159 = vld [vmem:[%s3 + $0xc0] sm:$0xf]
    %v160 = vld [vmem:[%s3 + $0xc4] sm:$0xf]
    %v161 = vld [vmem:[%s3 + $0xc8] sm:$0xf]
    %v162 = vld [vmem:[%s3 + $0xcc] sm:$0xf]
    %v163 = vld [vmem:[%s3 + $0xd0] sm:$0xf]
    %v164 = vld [vmem:[%s3 + $0xd4] sm:$0xf]
    %v165 = vld [vmem:[%s3 + $0xd8] sm:$0xf]
    %v166 = vld [vmem:[%s3 + $0xdc] sm:$0xf]
    %v167 = vld [vmem:[%s3 + $0xe0] sm:$0xf]
    %v168 = vld [vmem:[%s3 + $0xe4] sm:$0xf]
    %v169 = vld [vmem:[%s3 + $0xe8] sm:$0xf]
    %v170 = vld [vmem:[%s3 + $0xec] sm:$0xf]
    %v171 = vld [vmem:[%s3 + $0xf0] sm:$0xf]
    %v172 = vld [vmem:[%s3 + $0xf4] sm:$0xf]
    %v173 = vld [vmem:[%s3 + $0xf8] sm:$0xf]
    %v174 = vld [vmem:[%s3 + $0xfc] sm:$0xf]
    %v175 = vld [vmem:[%s3 + $0x100] sm:$0xf]
    %v176 = vld [vmem:[%s3 + $0x104] sm:$0xf]
    %v177 = vld [vmem:[%s3 + $0x108] sm:$0xf]
    %v178 = vld [vmem:[%s3 + $0x10c] sm:$0xf]
    %v179 = vld [vmem:[%s3 + $0x110] sm:$0xf]
    %v180 = vld [vmem:[%s3 + $0x114] sm:$0xf]
    %v181 = vld [vmem:[%s3 + $0x118] sm:$0xf]
    %v182 = vld [vmem:[%s3 + $0x11c] sm:$0xf]
    %v183 = vld [vmem:[%s3 + $0x120] sm:$0xf]
    %v184 = vld [vmem:[%s3 + $0x124] sm:$0xf]
    %v185 = vld [vmem:[%s3 + $0x128] sm:$0xf]
    %v186 = vld [vmem:[%s3 + $0x12c] sm:$0xf]
    %v187 = vld [vmem:[%s3 + $0x130] sm:$0xf]
    %v188 = vld [vmem:[%s3 + $0x134] sm:$0xf]
    %v189 = vld [vmem:[%s3 + $0x138] sm:$0xf]
    %v190 = vld [vmem:[%s3 + $0x13c] sm:$0xf]
    %v191 = vld [vmem:[%s3 + $0x140] sm:$0xf]
    %v192 = vld [vmem:[%s3 + $0x144] sm:$0xf]
    %v193 = vld [vmem:[%s3 + $0x148] sm:$0xf]
    %v194 = vld [vmem:[%s3 + $0x14c] sm:$0xf]
    %v195 = vld [vmem:[%s3 + $0x150] sm:$0xf]
    %v196 = vld [vmem:[%s3 + $0x154] sm:$0xf]
    %v197 = vld [vmem:[%s3 + $0x158] sm:$0xf]
    %v198 = vld [vmem:[%s3 + $0x15c] sm:$0xf]
    %v199 = vld [vmem:[%s3 + $0x160] sm:$0xf]
    %v200 = vld [vmem:[%s3 + $0x164] sm:$0xf]
    %v201 = vld [vmem:[%s3 + $0x168] sm:$0xf]
    %v202 = vld [vmem:[%s3 + $0x16c] sm:$0xf]
    %v203 = vld [vmem:[%s3 + $0x170] sm:$0xf]
    %v204 = vld [vmem:[%s3 + $0x174] sm:$0xf]
    %v205 = vld [vmem:[%s3 + $0x178] sm:$0xf]
    %v206 = vld [vmem:[%s3 + $0x17c] sm:$0xf]
    %v207 = vld [vmem:[%s3 + $0x180] sm:$0xf]
    %v208 = vld [vmem:[%s3 + $0x184] sm:$0xf]
    %v209 = vld [vmem:[%s3 + $0x188] sm:$0xf]
    %v210 = vld [vmem:[%s3 + $0x18c] sm:$0xf]
    %v211 = vld [vmem:[%s3 + $0x190] sm:$0xf]
    %v212 = vld [vmem:[%s3 + $0x194] sm:$0xf]
    %v213 = vld [vmem:[%s3 + $0x198] sm:$0xf]
    %v214 = vld [vmem:[%s3 + $0x19c] sm:$0xf]
    %v215 = vld [vmem:[%s3 + $0x1a0] sm:$0xf]
    %v216 = vld [vmem:[%s3 + $0x1a4] sm:$0xf]
    %v217 = vld [vmem:[%s3 + $0x1a8] sm:$0xf]
    %v218 = vld [vmem:[%s3 + $0x1ac] sm:$0xf]
    %v219 = vld [vmem:[%s3 + $0x1b0] sm:$0xf]
    %v220 = vld [vmem:[%s3 + $0x1b4] sm:$0xf]
    %v221 = vld [vmem:[%s3 + $0x1b8] sm:$0xf]
    %v222 = vld [vmem:[%s3 + $0x1bc] sm:$0xf]
    %v223 = vld [vmem:[%s3 + $0x1c0] sm:$0xf]
    %v224 = vld [vmem:[%s3 + $0x1c4] sm:$0xf]
    %v225 = vld [vmem:[%s3 + $0x1c8] sm:$0xf]
    %v226 = vld [vmem:[%s3 + $0x1cc] sm:$0xf]
    %v227 = vld [vmem:[%s3 + $0x1d0] sm:$0xf]
    %v228 = vld [vmem:[%s3 + $0x1d4] sm:$0xf]
    %v229 = vld [vmem:[%s3 + $0x1d8] sm:$0xf]
    %v230 = vld [vmem:[%s3 + $0x1dc] sm:$0xf]
    %v231 = vld [vmem:[%s3 + $0x1e0] sm:$0xf]
    %v232 = vld [vmem:[%s3 + $0x1e4] sm:$0xf]
    %v233 = vld [vmem:[%s3 + $0x1e8] sm:$0xf]
    %v234 = vld [vmem:[%s3 + $0x1ec] sm:$0xf]
    %v235 = vld [vmem:[%s3 + $0x1f0] sm:$0xf]
    %v236 = vld [vmem:[%s3 + $0x1f4] sm:$0xf]
    %v237 = vld [vmem:[%s3 + $0x1f8] sm:$0xf]
    %v238 = vld [vmem:[%s3 + $0x1fc] sm:$0xf]
    %v239 = vld [vmem:[%s5] sm:$0xff]
    %v240 = vld [vmem:[%s5 + $0x8] sm:$0xff]
    %v241 = vld [vmem:[%s5 + $0x10] sm:$0xff]
    %v242 = vld [vmem:[%s5 + $0x18] sm:$0xff]
    %v243 = vld [vmem:[#allocation2] sm:$0xf]
    %v244 = vld [vmem:[#allocation2 + $0x4] sm:$0xf]
    %v245 = vld [vmem:[#allocation2 + $0x8] sm:$0xf]
    %v246 = vld [vmem:[#allocation2 + $0xc] sm:$0xf]
    %v247 = vld [vmem:[#allocation2 + $0x10] sm:$0xf]
    %v248 = vld [vmem:[#allocation2 + $0x14] sm:$0xf]
    %v249 = vld [vmem:[#allocation2 + $0x18] sm:$0xf]
    %v250 = vld [vmem:[#allocation2 + $0x1c] sm:$0xf]
    %v251 = vld [vmem:[#allocation2 + $0x20] sm:$0xf]
    %v252 = vld [vmem:[#allocation2 + $0x24] sm:$0xf]
    %v253 = vld [vmem:[#allocation2 + $0x28] sm:$0xf]
    %v254 = vld [vmem:[#allocation2 + $0x2c] sm:$0xf]
    %v255 = vld [vmem:[#allocation2 + $0x30] sm:$0xf]
    %v256 = vld [vmem:[#allocation2 + $0x34] sm:$0xf]
    %v257 = vld [vmem:[#allocation2 + $0x38] sm:$0xf]
    %v258 = vld [vmem:[#allocation2 + $0x3c] sm:$0xf]
    %v259 = vld [vmem:[#allocation2 + $0x40] sm:$0xf]
    %v260 = vld [vmem:[#allocation2 + $0x44] sm:$0xf]
    %v261 = vld [vmem:[#allocation2 + $0x48] sm:$0xf]
    %v262 = vld [vmem:[#allocation2 + $0x4c] sm:$0xf]
    %v263 = vld [vmem:[#allocation2 + $0x50] sm:$0xf]
    %v264 = vld [vmem:[#allocation2 + $0x54] sm:$0xf]
    %v265 = vld [vmem:[#allocation2 + $0x58] sm:$0xf]
    %v266 = vld [vmem:[#allocation2 + $0x5c] sm:$0xf]
    %v267 = vld [vmem:[#allocation2 + $0x60] sm:$0xf]
    %v268 = vld [vmem:[#allocation2 + $0x64] sm:$0xf]
    %v269 = vld [vmem:[#allocation2 + $0x68] sm:$0xf]
    %v270 = vld [vmem:[#allocation2 + $0x6c] sm:$0xf]
    %v271 = vld [vmem:[#allocation2 + $0x70] sm:$0xf]
    %v272 = vld [vmem:[#allocation2 + $0x74] sm:$0xf]
    %v273 = vld [vmem:[#allocation2 + $0x78] sm:$0xf]
    %v274 = vld [vmem:[#allocation2 + $0x7c] sm:$0xf]
    %v275 = vld [vmem:[#allocation2 + $0x80] sm:$0xf]
    %v276 = vld [vmem:[#allocation2 + $0x84] sm:$0xf]
    %v277 = vld [vmem:[#allocation2 + $0x88] sm:$0xf]
    %v278 = vld [vmem:[#allocation2 + $0x8c] sm:$0xf]
    %v279 = vld [vmem:[#allocation2 + $0x90] sm:$0xf]
    %v280 = vld [vmem:[#allocation2 + $0x94] sm:$0xf]
    %v281 = vld [vmem:[#allocation2 + $0x98] sm:$0xf]
    %v282 = vld [vmem:[#allocation2 + $0x9c] sm:$0xf]
    %v283 = vld [vmem:[#allocation2 + $0xa0] sm:$0xf]
    %v284 = vld [vmem:[#allocation2 + $0xa4] sm:$0xf]
    %v285 = vld [vmem:[#allocation2 + $0xa8] sm:$0xf]
    %v286 = vld [vmem:[#allocation2 + $0xac] sm:$0xf]
    %v287 = vld [vmem:[#allocation2 + $0xb0] sm:$0xf]
    %v288 = vld [vmem:[#allocation2 + $0xb4] sm:$0xf]
    %v289 = vld [vmem:[#allocation2 + $0xb8] sm:$0xf]
    %v290 = vld [vmem:[#allocation2 + $0xbc] sm:$0xf]
    %v291 = vld [vmem:[#allocation2 + $0xc0] sm:$0xf]
    %v292 = vld [vmem:[#allocation2 + $0xc4] sm:$0xf]
    %v293 = vld [vmem:[#allocation2 + $0xc8] sm:$0xf]
    %v294 = vld [vmem:[#allocation2 + $0xcc] sm:$0xf]
    %v295 = vld [vmem:[#allocation2 + $0xd0] sm:$0xf]
    %v296 = vld [vmem:[#allocation2 + $0xd4] sm:$0xf]
    %v297 = vld [vmem:[#allocation2 + $0xd8] sm:$0xf]
    %v298 = vld [vmem:[#allocation2 + $0xdc] sm:$0xf]
    %v299 = vld [vmem:[#allocation2 + $0xe0] sm:$0xf]
    %v300 = vld [vmem:[#allocation2 + $0xe4] sm:$0xf]
    %v301 = vld [vmem:[#allocation2 + $0xe8] sm:$0xf]
    %v302 = vld [vmem:[#allocation2 + $0xec] sm:$0xf]
    %v303 = vld [vmem:[#allocation2 + $0xf0] sm:$0xf]
    %v304 = vld [vmem:[#allocation2 + $0xf4] sm:$0xf]
    %v305 = vld [vmem:[#allocation2 + $0xf8] sm:$0xf]
    %v306 = vld [vmem:[#allocation2 + $0xfc] sm:$0xf]
    %v307 = vld [vmem:[#allocation2 + $0x100] sm:$0xf]
    %v308 = vld [vmem:[#allocation2 + $0x104] sm:$0xf]
    %v309 = vld [vmem:[#allocation2 + $0x108] sm:$0xf]
    %v310 = vld [vmem:[#allocation2 + $0x10c] sm:$0xf]
    %v311 = vld [vmem:[#allocation2 + $0x110] sm:$0xf]
    %v312 = vld [vmem:[#allocation2 + $0x114] sm:$0xf]
    %v313 = vld [vmem:[#allocation2 + $0x118] sm:$0xf]
    %v314 = vld [vmem:[#allocation2 + $0x11c] sm:$0xf]
    %v315 = vld [vmem:[#allocation2 + $0x120] sm:$0xf]
    %v316 = vld [vmem:[#allocation2 + $0x124] sm:$0xf]
    %v317 = vld [vmem:[#allocation2 + $0x128] sm:$0xf]
    %v318 = vld [vmem:[#allocation2 + $0x12c] sm:$0xf]
    %v319 = vld [vmem:[#allocation2 + $0x130] sm:$0xf]
    %v320 = vld [vmem:[#allocation2 + $0x134] sm:$0xf]
    %v321 = vld [vmem:[#allocation2 + $0x138] sm:$0xf]
    %v322 = vld [vmem:[#allocation2 + $0x13c] sm:$0xf]
    %v323 = vld [vmem:[#allocation2 + $0x140] sm:$0xf]
    %v324 = vld [vmem:[#allocation2 + $0x144] sm:$0xf]
    %v325 = vld [vmem:[#allocation2 + $0x148] sm:$0xf]
    %v326 = vld [vmem:[#allocation2 + $0x14c] sm:$0xf]
    %v327 = vld [vmem:[#allocation2 + $0x150] sm:$0xf]
    %v328 = vld [vmem:[#allocation2 + $0x154] sm:$0xf]
    %v329 = vld [vmem:[#allocation2 + $0x158] sm:$0xf]
    %v330 = vld [vmem:[#allocation2 + $0x15c] sm:$0xf]
    %v331 = vld [vmem:[#allocation2 + $0x160] sm:$0xf]
    %v332 = vld [vmem:[#allocation2 + $0x164] sm:$0xf]
    %v333 = vld [vmem:[#allocation2 + $0x168] sm:$0xf]
    %v334 = vld [vmem:[#allocation2 + $0x16c] sm:$0xf]
    %v335 = vld [vmem:[#allocation2 + $0x170] sm:$0xf]
    %v336 = vld [vmem:[#allocation2 + $0x174] sm:$0xf]
    %v337 = vld [vmem:[#allocation2 + $0x178] sm:$0xf]
    %v338 = vld [vmem:[#allocation2 + $0x17c] sm:$0xf]
    %v339 = vld [vmem:[#allocation2 + $0x180] sm:$0xf]
    %v340 = vld [vmem:[#allocation2 + $0x184] sm:$0xf]
    %v341 = vld [vmem:[#allocation2 + $0x188] sm:$0xf]
    %v342 = vld [vmem:[#allocation2 + $0x18c] sm:$0xf]
    %v343 = vld [vmem:[#allocation2 + $0x190] sm:$0xf]
    %v344 = vld [vmem:[#allocation2 + $0x194] sm:$0xf]
    %v345 = vld [vmem:[#allocation2 + $0x198] sm:$0xf]
    %v346 = vld [vmem:[#allocation2 + $0x19c] sm:$0xf]
    %v347 = vld [vmem:[#allocation2 + $0x1a0] sm:$0xf]
    %v348 = vld [vmem:[#allocation2 + $0x1a4] sm:$0xf]
    %v349 = vld [vmem:[#allocation2 + $0x1a8] sm:$0xf]
    %v350 = vld [vmem:[#allocation2 + $0x1ac] sm:$0xf]
    %v351 = vld [vmem:[#allocation2 + $0x1b0] sm:$0xf]
    %v352 = vld [vmem:[#allocation2 + $0x1b4] sm:$0xf]
    %v353 = vld [vmem:[#allocation2 + $0x1b8] sm:$0xf]
    %v354 = vld [vmem:[#allocation2 + $0x1bc] sm:$0xf]
    %v355 = vld [vmem:[#allocation2 + $0x1c0] sm:$0xf]
    %v356 = vld [vmem:[#allocation2 + $0x1c4] sm:$0xf]
    %v357 = vld [vmem:[#allocation2 + $0x1c8] sm:$0xf]
    %v358 = vld [vmem:[#allocation2 + $0x1cc] sm:$0xf]
    %v359 = vld [vmem:[#allocation2 + $0x1d0] sm:$0xf]
    %v360 = vld [vmem:[#allocation2 + $0x1d4] sm:$0xf]
    %v361 = vld [vmem:[#allocation2 + $0x1d8] sm:$0xf]
    %v362 = vld [vmem:[#allocation2 + $0x1dc] sm:$0xf]
    %v363 = vld [vmem:[#allocation2 + $0x1e0] sm:$0xf]
    %v364 = vld [vmem:[#allocation2 + $0x1e4] sm:$0xf]
    %v365 = vld [vmem:[#allocation2 + $0x1e8] sm:$0xf]
    %v366 = vld [vmem:[#allocation2 + $0x1ec] sm:$0xf]
    %v367 = vld [vmem:[#allocation2 + $0x1f0] sm:$0xf]
    %v368 = vld [vmem:[#allocation2 + $0x1f4] sm:$0xf]
    %v369 = vld [vmem:[#allocation2 + $0x1f8] sm:$0xf]
    %v370 = vld [vmem:[#allocation2 + $0x1fc] sm:$0xf]
    %v371 = vld [vmem:[%s2] sm:$0xff]
    %v372 = vld [vmem:[%s4] sm:$0x1]
    %v373 = vld [vmem:[%s6] sm:$0xff]
    %v374 = vld [vmem:[%s8] sm:$0x1]
    %v375 = vld [vmem:[%s0] sm:$0x3]
    %v376 = vpack.c.bf16 %v375, %v375
    %v378 = vlaneseq
    %v379 = vshrl.u32 %v378, 7
    %v380 = vsub.s32 0, %v379
    %v381 = vrot.slane %v371, %v380
    %v382 = vlaneseq
    %v383 = vshrl.u32 %v382, 7
    %v384 = vsub.s32 1, %v383
    %v385 = vrot.slane %v371, %v384
    %v386 = vlaneseq
    %v387 = vshrl.u32 %v386, 7
    %v388 = vsub.s32 2, %v387
    %v389 = vrot.slane %v371, %v388
    %v390 = vlaneseq
    %v391 = vshrl.u32 %v390, 7
    %v392 = vsub.s32 3, %v391
    %v393 = vrot.slane %v371, %v392
    %v394 = vlaneseq
    %v395 = vshrl.u32 %v394, 7
    %v396 = vsub.s32 4, %v395
    %v397 = vrot.slane %v371, %v396
    %v398 = vlaneseq
    %v399 = vshrl.u32 %v398, 7
    %v400 = vsub.s32 5, %v399
    %v401 = vrot.slane %v371, %v400
    %v402 = vlaneseq
    %v403 = vshrl.u32 %v402, 7
    %v404 = vsub.s32 6, %v403
    %v405 = vrot.slane %v371, %v404
    %v406 = vlaneseq
    %v407 = vshrl.u32 %v406, 7
    %v408 = vsub.s32 7, %v407
    %v409 = vrot.slane %v371, %v408
    %v482 = vunpack.c.l.b16 %v47
    %v483 = vunpack.c.h.b16 %v47
    %v484 = vunpack.c.l.b16 %v48
    %v485 = vunpack.c.h.b16 %v48
    %v486 = vunpack.c.l.b16 %v49
    %v487 = vunpack.c.h.b16 %v49
    %v488 = vunpack.c.l.b16 %v50
    %v489 = vunpack.c.h.b16 %v50
    %v490 = vunpack.c.l.b16 %v51
    %v491 = vunpack.c.h.b16 %v51
    %v492 = vunpack.c.l.b16 %v52
    %v493 = vunpack.c.h.b16 %v52
    %v494 = vunpack.c.l.b16 %v53
    %v495 = vunpack.c.h.b16 %v53
    %v496 = vunpack.c.l.b16 %v54
    %v497 = vunpack.c.h.b16 %v54
    %v498 = vunpack.c.l.b16 %v55
    %v499 = vunpack.c.h.b16 %v55
    %v500 = vunpack.c.l.b16 %v56
    %v501 = vunpack.c.h.b16 %v56
    %v502 = vunpack.c.l.b16 %v57
    %v503 = vunpack.c.h.b16 %v57
    %v504 = vunpack.c.l.b16 %v58
    %v505 = vunpack.c.h.b16 %v58
    %v506 = vunpack.c.l.b16 %v59
    %v507 = vunpack.c.h.b16 %v59
    %v508 = vunpack.c.l.b16 %v60
    %v509 = vunpack.c.h.b16 %v60
    %v510 = vunpack.c.l.b16 %v61
    %v511 = vunpack.c.h.b16 %v61
    %v512 = vunpack.c.l.b16 %v62
    %v513 = vunpack.c.h.b16 %v62
    %v514 = vunpack.c.l.b16 %v63
    %v515 = vunpack.c.h.b16 %v63
    %v516 = vunpack.c.l.b16 %v64
    %v517 = vunpack.c.h.b16 %v64
    %v518 = vunpack.c.l.b16 %v65
    %v519 = vunpack.c.h.b16 %v65
    %v520 = vunpack.c.l.b16 %v66
    %v521 = vunpack.c.h.b16 %v66
    %v522 = vunpack.c.l.b16 %v67
    %v523 = vunpack.c.h.b16 %v67
    %v524 = vunpack.c.l.b16 %v68
    %v525 = vunpack.c.h.b16 %v68
    %v526 = vunpack.c.l.b16 %v69
    %v527 = vunpack.c.h.b16 %v69
    %v528 = vunpack.c.l.b16 %v70
    %v529 = vunpack.c.h.b16 %v70
    %v530 = vunpack.c.l.b16 %v71
    %v531 = vunpack.c.h.b16 %v71
    %v532 = vunpack.c.l.b16 %v72
    %v533 = vunpack.c.h.b16 %v72
    %v534 = vunpack.c.l.b16 %v73
    %v535 = vunpack.c.h.b16 %v73
    %v536 = vunpack.c.l.b16 %v74
    %v537 = vunpack.c.h.b16 %v74
    %v538 = vunpack.c.l.b16 %v75
    %v539 = vunpack.c.h.b16 %v75
    %v540 = vunpack.c.l.b16 %v76
    %v541 = vunpack.c.h.b16 %v76
    %v542 = vunpack.c.l.b16 %v77
    %v543 = vunpack.c.h.b16 %v77
    %v544 = vunpack.c.l.b16 %v78
    %v545 = vunpack.c.h.b16 %v78
    %v546 = vunpack.c.l.b16 %v79
    %v547 = vunpack.c.h.b16 %v79
    %v548 = vunpack.c.l.b16 %v80
    %v549 = vunpack.c.h.b16 %v80
    %v550 = vunpack.c.l.b16 %v81
    %v551 = vunpack.c.h.b16 %v81
    %v552 = vunpack.c.l.b16 %v82
    %v553 = vunpack.c.h.b16 %v82
    %v554 = vunpack.c.l.b16 %v83
    %v555 = vunpack.c.h.b16 %v83
    %v556 = vunpack.c.l.b16 %v84
    %v557 = vunpack.c.h.b16 %v84
    %v558 = vunpack.c.l.b16 %v85
    %v559 = vunpack.c.h.b16 %v85
    %v560 = vunpack.c.l.b16 %v86
    %v561 = vunpack.c.h.b16 %v86
    %v562 = vunpack.c.l.b16 %v87
    %v563 = vunpack.c.h.b16 %v87
    %v564 = vunpack.c.l.b16 %v88
    %v565 = vunpack.c.h.b16 %v88
    %v566 = vunpack.c.l.b16 %v89
    %v567 = vunpack.c.h.b16 %v89
    %v568 = vunpack.c.l.b16 %v90
    %v569 = vunpack.c.h.b16 %v90
    %v570 = vunpack.c.l.b16 %v91
    %v571 = vunpack.c.h.b16 %v91
    %v572 = vunpack.c.l.b16 %v92
    %v573 = vunpack.c.h.b16 %v92
    %v574 = vunpack.c.l.b16 %v93
    %v575 = vunpack.c.h.b16 %v93
    %v576 = vunpack.c.l.b16 %v94
    %v577 = vunpack.c.h.b16 %v94
    %v578 = vunpack.c.l.b16 %v95
    %v579 = vunpack.c.h.b16 %v95
    %v580 = vunpack.c.l.b16 %v96
    %v581 = vunpack.c.h.b16 %v96
    %v582 = vunpack.c.l.b16 %v97
    %v583 = vunpack.c.h.b16 %v97
    %v584 = vunpack.c.l.b16 %v98
    %v585 = vunpack.c.h.b16 %v98
    %v586 = vunpack.c.l.b16 %v99
    %v587 = vunpack.c.h.b16 %v99
    %v588 = vunpack.c.l.b16 %v100
    %v589 = vunpack.c.h.b16 %v100
    %v590 = vunpack.c.l.b16 %v101
    %v591 = vunpack.c.h.b16 %v101
    %v592 = vunpack.c.l.b16 %v102
    %v593 = vunpack.c.h.b16 %v102
    %v594 = vunpack.c.l.b16 %v103
    %v595 = vunpack.c.h.b16 %v103
    %v596 = vunpack.c.l.b16 %v104
    %v597 = vunpack.c.h.b16 %v104
    %v598 = vunpack.c.l.b16 %v105
    %v599 = vunpack.c.h.b16 %v105
    %v600 = vunpack.c.l.b16 %v106
    %v601 = vunpack.c.h.b16 %v106
    %v602 = vunpack.c.l.b16 %v107
    %v603 = vunpack.c.h.b16 %v107
    %v604 = vunpack.c.l.b16 %v108
    %v605 = vunpack.c.h.b16 %v108
    %v606 = vunpack.c.l.b16 %v109
    %v607 = vunpack.c.h.b16 %v109
    %v608 = vunpack.c.l.b16 %v110
    %v609 = vunpack.c.h.b16 %v110
    %v610 = vpack.c.b16 %v490, %v482
    %v611 = vpack.c.b16 %v491, %v483
    %v612 = vpack.c.b16 %v492, %v484
    %v613 = vpack.c.b16 %v493, %v485
    %v614 = vpack.c.b16 %v494, %v486
    %v615 = vpack.c.b16 %v495, %v487
    %v616 = vpack.c.b16 %v496, %v488
    %v617 = vpack.c.b16 %v497, %v489
    %v618 = vpack.c.b16 %v506, %v498
    %v619 = vpack.c.b16 %v507, %v499
    %v620 = vpack.c.b16 %v508, %v500
    %v621 = vpack.c.b16 %v509, %v501
    %v622 = vpack.c.b16 %v510, %v502
    %v623 = vpack.c.b16 %v511, %v503
    %v624 = vpack.c.b16 %v512, %v504
    %v625 = vpack.c.b16 %v513, %v505
    %v626 = vpack.c.b16 %v522, %v514
    %v627 = vpack.c.b16 %v523, %v515
    %v628 = vpack.c.b16 %v524, %v516
    %v629 = vpack.c.b16 %v525, %v517
    %v630 = vpack.c.b16 %v526, %v518
    %v631 = vpack.c.b16 %v527, %v519
    %v632 = vpack.c.b16 %v528, %v520
    %v633 = vpack.c.b16 %v529, %v521
    %v634 = vpack.c.b16 %v538, %v530
    %v635 = vpack.c.b16 %v539, %v531
    %v636 = vpack.c.b16 %v540, %v532
    %v637 = vpack.c.b16 %v541, %v533
    %v638 = vpack.c.b16 %v542, %v534
    %v639 = vpack.c.b16 %v543, %v535
    %v640 = vpack.c.b16 %v544, %v536
    %v641 = vpack.c.b16 %v545, %v537
    %v642 = vpack.c.b16 %v554, %v546
    %v643 = vpack.c.b16 %v555, %v547
    %v644 = vpack.c.b16 %v556, %v548
    %v645 = vpack.c.b16 %v557, %v549
    %v646 = vpack.c.b16 %v558, %v550
    %v647 = vpack.c.b16 %v559, %v551
    %v648 = vpack.c.b16 %v560, %v552
    %v649 = vpack.c.b16 %v561, %v553
    %v650 = vpack.c.b16 %v570, %v562
    %v651 = vpack.c.b16 %v571, %v563
    %v652 = vpack.c.b16 %v572, %v564
    %v653 = vpack.c.b16 %v573, %v565
    %v654 = vpack.c.b16 %v574, %v566
    %v655 = vpack.c.b16 %v575, %v567
    %v656 = vpack.c.b16 %v576, %v568
    %v657 = vpack.c.b16 %v577, %v569
    %v658 = vpack.c.b16 %v586, %v578
    %v659 = vpack.c.b16 %v587, %v579
    %v660 = vpack.c.b16 %v588, %v580
    %v661 = vpack.c.b16 %v589, %v581
    %v662 = vpack.c.b16 %v590, %v582
    %v663 = vpack.c.b16 %v591, %v583
    %v664 = vpack.c.b16 %v592, %v584
    %v665 = vpack.c.b16 %v593, %v585
    %v666 = vpack.c.b16 %v602, %v594
    %v667 = vpack.c.b16 %v603, %v595
    %v668 = vpack.c.b16 %v604, %v596
    %v669 = vpack.c.b16 %v605, %v597
    %v670 = vpack.c.b16 %v606, %v598
    %v671 = vpack.c.b16 %v607, %v599
    %v672 = vpack.c.b16 %v608, %v600
    %v673 = vpack.c.b16 %v609, %v601
    %738 = vmatprep.subr.bf16.mxu0 %v611
    %739 = vmatpush1.bf16.msra.mxu0 %v610
    %740 = vmatprep.subr.bf16.mxu0 %v619
    %741 = vmatpush1.bf16.msra.mxu0 %v618
    %742 = vmatprep.subr.bf16.mxu0 %v627
    %743 = vmatpush1.bf16.msra.mxu0 %v626
    %744 = vmatprep.subr.bf16.mxu0 %v635
    %745 = vmatpush1.bf16.msra.mxu0 %v634
    %746 = vmatprep.subr.bf16.mxu0 %v643
    %747 = vmatpush1.bf16.msra.mxu0 %v642
    %748 = vmatprep.subr.bf16.mxu0 %v651
    %749 = vmatpush1.bf16.msra.mxu0 %v650
    %750 = vmatprep.subr.bf16.mxu0 %v659
    %751 = vmatpush1.bf16.msra.mxu0 %v658
    %752 = vmatprep.subr.bf16.mxu0 %v667
    %753 = vmatpush1.bf16.msra.mxu0 %v666
    %754 = vmatprep.subr.bf16.mxu0 0
    %755 = vmatpush1.bf16.msra.mxu0 0
    %756 = vmatprep.subr.bf16.mxu0 0
    %757 = vmatpush1.bf16.msra.mxu0 0
    %758 = vmatprep.subr.bf16.mxu0 0
    %759 = vmatpush1.bf16.msra.mxu0 0
    %760 = vmatprep.subr.bf16.mxu0 0
    %761 = vmatpush1.bf16.msra.mxu0 0
    %762 = vmatprep.subr.bf16.mxu0 0
    %763 = vmatpush1.bf16.msra.mxu0 0
    %764 = vmatprep.subr.bf16.mxu0 0
    %765 = vmatpush1.bf16.msra.mxu0 0
    %766 = vmatprep.subr.bf16.mxu0 0
    %767 = vmatpush1.bf16.msra.mxu0 0
    %768 = vmatprep.subr.bf16.mxu0 0
    %769 = vmatpush1.bf16.msra.mxu0 0
    %770 = vmatprep.mubr.bf16.mxu0 0
    %771 = vmatmul.mubr.bf16.gmra.mrb[0].mxu0 %v376
    %v772 = vpop.f32.mrb[0].mxu0
    %v773 = vadd.f32 %v381, %v772
    %v774 = vpop.f32.mrb[0].mxu0
    %v775 = vadd.f32 %v385, %v774
    %v776 = vpop.f32.mrb[0].mxu0
    %v777 = vpop.f32.mrb[0].mxu0
    %778 = vdwg.mxu0
    %779 = vmatprep.subr.bf16.mxu0 %v613
    %780 = vmatpush1.bf16.msra.mxu0 %v612
    %781 = vmatprep.subr.bf16.mxu0 %v621
    %782 = vmatpush1.bf16.msra.mxu0 %v620
    %783 = vmatprep.subr.bf16.mxu0 %v629
    %784 = vmatpush1.bf16.msra.mxu0 %v628
    %785 = vmatprep.subr.bf16.mxu0 %v637
    %786 = vmatpush1.bf16.msra.mxu0 %v636
    %787 = vmatprep.subr.bf16.mxu0 %v645
    %788 = vmatpush1.bf16.msra.mxu0 %v644
    %789 = vmatprep.subr.bf16.mxu0 %v653
    %790 = vmatpush1.bf16.msra.mxu0 %v652
    %791 = vmatprep.subr.bf16.mxu0 %v661
    %792 = vmatpush1.bf16.msra.mxu0 %v660
    %793 = vmatprep.subr.bf16.mxu0 %v669
    %794 = vmatpush1.bf16.msra.mxu0 %v668
    %795 = vmatprep.subr.bf16.mxu0 0
    %796 = vmatpush1.bf16.msra.mxu0 0
    %797 = vmatprep.subr.bf16.mxu0 0
    %798 = vmatpush1.bf16.msra.mxu0 0
    %799 = vmatprep.subr.bf16.mxu0 0
    %800 = vmatpush1.bf16.msra.mxu0 0
    %801 = vmatprep.subr.bf16.mxu0 0
    %802 = vmatpush1.bf16.msra.mxu0 0
    %803 = vmatprep.subr.bf16.mxu0 0
    %804 = vmatpush1.bf16.msra.mxu0 0
    %805 = vmatprep.subr.bf16.mxu0 0
    %806 = vmatpush1.bf16.msra.mxu0 0
    %807 = vmatprep.subr.bf16.mxu0 0
    %808 = vmatpush1.bf16.msra.mxu0 0
    %809 = vmatprep.subr.bf16.mxu0 0
    %810 = vmatpush1.bf16.msra.mxu0 0
    %811 = vmatprep.mubr.bf16.mxu0 0
    %812 = vmatmul.mubr.bf16.gmra.mrb[0].mxu0 %v376
    %v813 = vpop.f32.mrb[0].mxu0
    %v814 = vadd.f32 %v389, %v813
    %v815 = vpop.f32.mrb[0].mxu0
    %v816 = vadd.f32 %v393, %v815
    %v817 = vpop.f32.mrb[0].mxu0
    %v818 = vpop.f32.mrb[0].mxu0
    %819 = vdwg.mxu0
    %820 = vmatprep.subr.bf16.mxu0 %v615
    %821 = vmatpush1.bf16.msra.mxu0 %v614
    %822 = vmatprep.subr.bf16.mxu0 %v623
    %823 = vmatpush1.bf16.msra.mxu0 %v622
    %824 = vmatprep.subr.bf16.mxu0 %v631
    %825 = vmatpush1.bf16.msra.mxu0 %v630
    %826 = vmatprep.subr.bf16.mxu0 %v639
    %827 = vmatpush1.bf16.msra.mxu0 %v638
    %828 = vmatprep.subr.bf16.mxu0 %v647
    %829 = vmatpush1.bf16.msra.mxu0 %v646
    %830 = vmatprep.subr.bf16.mxu0 %v655
    %831 = vmatpush1.bf16.msra.mxu0 %v654
    %832 = vmatprep.subr.bf16.mxu0 %v663
    %833 = vmatpush1.bf16.msra.mxu0 %v662
    %834 = vmatprep.subr.bf16.mxu0 %v671
    %835 = vmatpush1.bf16.msra.mxu0 %v670
    %836 = vmatprep.subr.bf16.mxu0 0
    %837 = vmatpush1.bf16.msra.mxu0 0
    %838 = vmatprep.subr.bf16.mxu0 0
    %839 = vmatpush1.bf16.msra.mxu0 0
    %840 = vmatprep.subr.bf16.mxu0 0
    %841 = vmatpush1.bf16.msra.mxu0 0
    %842 = vmatprep.subr.bf16.mxu0 0
    %843 = vmatpush1.bf16.msra.mxu0 0
    %844 = vmatprep.subr.bf16.mxu0 0
    %845 = vmatpush1.bf16.msra.mxu0 0
    %846 = vmatprep.subr.bf16.mxu0 0
    %847 = vmatpush1.bf16.msra.mxu0 0
    %848 = vmatprep.subr.bf16.mxu0 0
    %849 = vmatpush1.bf16.msra.mxu0 0
    %850 = vmatprep.subr.bf16.mxu0 0
    %851 = vmatpush1.bf16.msra.mxu0 0
    %852 = vmatprep.mubr.bf16.mxu0 0
    %853 = vmatmul.mubr.bf16.gmra.mrb[0].mxu0 %v376
    %v854 = vpop.f32.mrb[0].mxu0
    %v855 = vadd.f32 %v397, %v854
    %v856 = vpop.f32.mrb[0].mxu0
    %v857 = vadd.f32 %v401, %v856
    %v858 = vpop.f32.mrb[0].mxu0
    %v859 = vpop.f32.mrb[0].mxu0
    %860 = vdwg.mxu0
    %861 = vmatprep.subr.bf16.mxu0 %v617
    %862 = vmatpush1.bf16.msra.mxu0 %v616
    %863 = vmatprep.subr.bf16.mxu0 %v625
    %864 = vmatpush1.bf16.msra.mxu0 %v624
    %865 = vmatprep.subr.bf16.mxu0 %v633
    %866 = vmatpush1.bf16.msra.mxu0 %v632
    %867 = vmatprep.subr.bf16.mxu0 %v641
    %868 = vmatpush1.bf16.msra.mxu0 %v640
    %869 = vmatprep.subr.bf16.mxu0 %v649
    %870 = vmatpush1.bf16.msra.mxu0 %v648
    %871 = vmatprep.subr.bf16.mxu0 %v657
    %872 = vmatpush1.bf16.msra.mxu0 %v656
    %873 = vmatprep.subr.bf16.mxu0 %v665
    %874 = vmatpush1.bf16.msra.mxu0 %v664
    %875 = vmatprep.subr.bf16.mxu0 %v673
    %876 = vmatpush1.bf16.msra.mxu0 %v672
    %877 = vmatprep.subr.bf16.mxu0 0
    %878 = vmatpush1.bf16.msra.mxu0 0
    %879 = vmatprep.subr.bf16.mxu0 0
    %880 = vmatpush1.bf16.msra.mxu0 0
    %881 = vmatprep.subr.bf16.mxu0 0
    %882 = vmatpush1.bf16.msra.mxu0 0
    %883 = vmatprep.subr.bf16.mxu0 0
    %884 = vmatpush1.bf16.msra.mxu0 0
    %885 = vmatprep.subr.bf16.mxu0 0
    %886 = vmatpush1.bf16.msra.mxu0 0
    %887 = vmatprep.subr.bf16.mxu0 0
    %888 = vmatpush1.bf16.msra.mxu0 0
    %889 = vmatprep.subr.bf16.mxu0 0
    %890 = vmatpush1.bf16.msra.mxu0 0
    %891 = vmatprep.subr.bf16.mxu0 0
    %892 = vmatpush1.bf16.msra.mxu0 0
    %893 = vmatprep.mubr.bf16.mxu0 0
    %894 = vmatmul.mubr.bf16.gmra.mrb[0].mxu0 %v376
    %v895 = vpop.f32.mrb[0].mxu0
    %v896 = vadd.f32 %v405, %v895
    %v897 = vpop.f32.mrb[0].mxu0
    %v898 = vadd.f32 %v409, %v897
    %v899 = vpop.f32.mrb[0].mxu0
    %v900 = vpop.f32.mrb[0].mxu0
    %901 = vdwg.mxu0
    %v902 = vmax.f32 %v773, 0.0
    %v903 = vmax.f32 %v775, 0.0
    %v904 = vmax.f32 %v814, 0.0
    %v905 = vmax.f32 %v816, 0.0
    %v906 = vmax.f32 %v855, 0.0
    %v907 = vmax.f32 %v857, 0.0
    %v908 = vmax.f32 %v896, 0.0
    %v909 = vmax.f32 %v898, 0.0
    %v910 = vpack.c.bf16 %v902, %v902
    %v911 = vpack.c.bf16 %v903, %v903
    %v912 = vpack.c.bf16 %v904, %v904
    %v913 = vpack.c.bf16 %v905, %v905
    %v914 = vpack.c.bf16 %v906, %v906
    %v915 = vpack.c.bf16 %v907, %v907
    %v916 = vpack.c.bf16 %v908, %v908
    %v917 = vpack.c.bf16 %v909, %v909
    %v919 = vlaneseq
    %v920 = vshrl.u32 %v919, 7
    %v921 = vsub.s32 0, %v920
    %v922 = vrot.slane %v372, %v921
    %v1052 = vunpack.c.l.b16 %v111
    %v1053 = vunpack.c.l.b16 %v112
    %v1054 = vunpack.c.l.b16 %v113
    %v1055 = vunpack.c.l.b16 %v114
    %v1056 = vunpack.c.l.b16 %v115
    %v1057 = vunpack.c.l.b16 %v116
    %v1058 = vunpack.c.l.b16 %v117
    %v1059 = vunpack.c.l.b16 %v118
    %v1060 = vunpack.c.l.b16 %v119
    %v1061 = vunpack.c.l.b16 %v120
    %v1062 = vunpack.c.l.b16 %v121
    %v1063 = vunpack.c.l.b16 %v122
    %v1064 = vunpack.c.l.b16 %v123
    %v1065 = vunpack.c.l.b16 %v124
    %v1066 = vunpack.c.l.b16 %v125
    %v1067 = vunpack.c.l.b16 %v126
    %v1068 = vunpack.c.l.b16 %v127
    %v1069 = vunpack.c.l.b16 %v128
    %v1070 = vunpack.c.l.b16 %v129
    %v1071 = vunpack.c.l.b16 %v130
    %v1072 = vunpack.c.l.b16 %v131
    %v1073 = vunpack.c.l.b16 %v132
    %v1074 = vunpack.c.l.b16 %v133
    %v1075 = vunpack.c.l.b16 %v134
    %v1076 = vunpack.c.l.b16 %v135
    %v1077 = vunpack.c.l.b16 %v136
    %v1078 = vunpack.c.l.b16 %v137
    %v1079 = vunpack.c.l.b16 %v138
    %v1080 = vunpack.c.l.b16 %v139
    %v1081 = vunpack.c.l.b16 %v140
    %v1082 = vunpack.c.l.b16 %v141
    %v1083 = vunpack.c.l.b16 %v142
    %v1084 = vunpack.c.l.b16 %v143
    %v1085 = vunpack.c.l.b16 %v144
    %v1086 = vunpack.c.l.b16 %v145
    %v1087 = vunpack.c.l.b16 %v146
    %v1088 = vunpack.c.l.b16 %v147
    %v1089 = vunpack.c.l.b16 %v148
    %v1090 = vunpack.c.l.b16 %v149
    %v1091 = vunpack.c.l.b16 %v150
    %v1092 = vunpack.c.l.b16 %v151
    %v1093 = vunpack.c.l.b16 %v152
    %v1094 = vunpack.c.l.b16 %v153
    %v1095 = vunpack.c.l.b16 %v154
    %v1096 = vunpack.c.l.b16 %v155
    %v1097 = vunpack.c.l.b16 %v156
    %v1098 = vunpack.c.l.b16 %v157
    %v1099 = vunpack.c.l.b16 %v158
    %v1100 = vunpack.c.l.b16 %v159
    %v1101 = vunpack.c.l.b16 %v160
    %v1102 = vunpack.c.l.b16 %v161
    %v1103 = vunpack.c.l.b16 %v162
    %v1104 = vunpack.c.l.b16 %v163
    %v1105 = vunpack.c.l.b16 %v164
    %v1106 = vunpack.c.l.b16 %v165
    %v1107 = vunpack.c.l.b16 %v166
    %v1108 = vunpack.c.l.b16 %v167
    %v1109 = vunpack.c.l.b16 %v168
    %v1110 = vunpack.c.l.b16 %v169
    %v1111 = vunpack.c.l.b16 %v170
    %v1112 = vunpack.c.l.b16 %v171
    %v1113 = vunpack.c.l.b16 %v172
    %v1114 = vunpack.c.l.b16 %v173
    %v1115 = vunpack.c.l.b16 %v174
    %v1116 = vunpack.c.l.b16 %v175
    %v1117 = vunpack.c.l.b16 %v176
    %v1118 = vunpack.c.l.b16 %v177
    %v1119 = vunpack.c.l.b16 %v178
    %v1120 = vunpack.c.l.b16 %v179
    %v1121 = vunpack.c.l.b16 %v180
    %v1122 = vunpack.c.l.b16 %v181
    %v1123 = vunpack.c.l.b16 %v182
    %v1124 = vunpack.c.l.b16 %v183
    %v1125 = vunpack.c.l.b16 %v184
    %v1126 = vunpack.c.l.b16 %v185
    %v1127 = vunpack.c.l.b16 %v186
    %v1128 = vunpack.c.l.b16 %v187
    %v1129 = vunpack.c.l.b16 %v188
    %v1130 = vunpack.c.l.b16 %v189
    %v1131 = vunpack.c.l.b16 %v190
    %v1132 = vunpack.c.l.b16 %v191
    %v1133 = vunpack.c.l.b16 %v192
    %v1134 = vunpack.c.l.b16 %v193
    %v1135 = vunpack.c.l.b16 %v194
    %v1136 = vunpack.c.l.b16 %v195
    %v1137 = vunpack.c.l.b16 %v196
    %v1138 = vunpack.c.l.b16 %v197
    %v1139 = vunpack.c.l.b16 %v198
    %v1140 = vunpack.c.l.b16 %v199
    %v1141 = vunpack.c.l.b16 %v200
    %v1142 = vunpack.c.l.b16 %v201
    %v1143 = vunpack.c.l.b16 %v202
    %v1144 = vunpack.c.l.b16 %v203
    %v1145 = vunpack.c.l.b16 %v204
    %v1146 = vunpack.c.l.b16 %v205
    %v1147 = vunpack.c.l.b16 %v206
    %v1148 = vunpack.c.l.b16 %v207
    %v1149 = vunpack.c.l.b16 %v208
    %v1150 = vunpack.c.l.b16 %v209
    %v1151 = vunpack.c.l.b16 %v210
    %v1152 = vunpack.c.l.b16 %v211
    %v1153 = vunpack.c.l.b16 %v212
    %v1154 = vunpack.c.l.b16 %v213
    %v1155 = vunpack.c.l.b16 %v214
    %v1156 = vunpack.c.l.b16 %v215
    %v1157 = vunpack.c.l.b16 %v216
    %v1158 = vunpack.c.l.b16 %v217
    %v1159 = vunpack.c.l.b16 %v218
    %v1160 = vunpack.c.l.b16 %v219
    %v1161 = vunpack.c.l.b16 %v220
    %v1162 = vunpack.c.l.b16 %v221
    %v1163 = vunpack.c.l.b16 %v222
    %v1164 = vunpack.c.l.b16 %v223
    %v1165 = vunpack.c.l.b16 %v224
    %v1166 = vunpack.c.l.b16 %v225
    %v1167 = vunpack.c.l.b16 %v226
    %v1168 = vunpack.c.l.b16 %v227
    %v1169 = vunpack.c.l.b16 %v228
    %v1170 = vunpack.c.l.b16 %v229
    %v1171 = vunpack.c.l.b16 %v230
    %v1172 = vunpack.c.l.b16 %v231
    %v1173 = vunpack.c.l.b16 %v232
    %v1174 = vunpack.c.l.b16 %v233
    %v1175 = vunpack.c.l.b16 %v234
    %v1176 = vunpack.c.l.b16 %v235
    %v1177 = vunpack.c.l.b16 %v236
    %v1178 = vunpack.c.l.b16 %v237
    %v1179 = vunpack.c.l.b16 %v238
    %v1180 = vpack.c.b16 %v1053, %v1052
    %v1181 = vpack.c.b16 %v1055, %v1054
    %v1182 = vpack.c.b16 %v1057, %v1056
    %v1183 = vpack.c.b16 %v1059, %v1058
    %v1184 = vpack.c.b16 %v1061, %v1060
    %v1185 = vpack.c.b16 %v1063, %v1062
    %v1186 = vpack.c.b16 %v1065, %v1064
    %v1187 = vpack.c.b16 %v1067, %v1066
    %v1188 = vpack.c.b16 %v1069, %v1068
    %v1189 = vpack.c.b16 %v1071, %v1070
    %v1190 = vpack.c.b16 %v1073, %v1072
    %v1191 = vpack.c.b16 %v1075, %v1074
    %v1192 = vpack.c.b16 %v1077, %v1076
    %v1193 = vpack.c.b16 %v1079, %v1078
    %v1194 = vpack.c.b16 %v1081, %v1080
    %v1195 = vpack.c.b16 %v1083, %v1082
    %v1196 = vpack.c.b16 %v1085, %v1084
    %v1197 = vpack.c.b16 %v1087, %v1086
    %v1198 = vpack.c.b16 %v1089, %v1088
    %v1199 = vpack.c.b16 %v1091, %v1090
    %v1200 = vpack.c.b16 %v1093, %v1092
    %v1201 = vpack.c.b16 %v1095, %v1094
    %v1202 = vpack.c.b16 %v1097, %v1096
    %v1203 = vpack.c.b16 %v1099, %v1098
    %v1204 = vpack.c.b16 %v1101, %v1100
    %v1205 = vpack.c.b16 %v1103, %v1102
    %v1206 = vpack.c.b16 %v1105, %v1104
    %v1207 = vpack.c.b16 %v1107, %v1106
    %v1208 = vpack.c.b16 %v1109, %v1108
    %v1209 = vpack.c.b16 %v1111, %v1110
    %v1210 = vpack.c.b16 %v1113, %v1112
    %v1211 = vpack.c.b16 %v1115, %v1114
    %v1212 = vpack.c.b16 %v1117, %v1116
    %v1213 = vpack.c.b16 %v1119, %v1118
    %v1214 = vpack.c.b16 %v1121, %v1120
    %v1215 = vpack.c.b16 %v1123, %v1122
    %v1216 = vpack.c.b16 %v1125, %v1124
    %v1217 = vpack.c.b16 %v1127, %v1126
    %v1218 = vpack.c.b16 %v1129, %v1128
    %v1219 = vpack.c.b16 %v1131, %v1130
    %v1220 = vpack.c.b16 %v1133, %v1132
    %v1221 = vpack.c.b16 %v1135, %v1134
    %v1222 = vpack.c.b16 %v1137, %v1136
    %v1223 = vpack.c.b16 %v1139, %v1138
    %v1224 = vpack.c.b16 %v1141, %v1140
    %v1225 = vpack.c.b16 %v1143, %v1142
    %v1226 = vpack.c.b16 %v1145, %v1144
    %v1227 = vpack.c.b16 %v1147, %v1146
    %v1228 = vpack.c.b16 %v1149, %v1148
    %v1229 = vpack.c.b16 %v1151, %v1150
    %v1230 = vpack.c.b16 %v1153, %v1152
    %v1231 = vpack.c.b16 %v1155, %v1154
    %v1232 = vpack.c.b16 %v1157, %v1156
    %v1233 = vpack.c.b16 %v1159, %v1158
    %v1234 = vpack.c.b16 %v1161, %v1160
    %v1235 = vpack.c.b16 %v1163, %v1162
    %v1236 = vpack.c.b16 %v1165, %v1164
    %v1237 = vpack.c.b16 %v1167, %v1166
    %v1238 = vpack.c.b16 %v1169, %v1168
    %v1239 = vpack.c.b16 %v1171, %v1170
    %v1240 = vpack.c.b16 %v1173, %v1172
    %v1241 = vpack.c.b16 %v1175, %v1174
    %v1242 = vpack.c.b16 %v1177, %v1176
    %v1243 = vpack.c.b16 %v1179, %v1178
    %1308 = vmatprep.subr.bf16.mxu0 0
    %1309 = vmatpush1.bf16.msra.mxu0 %v1180
    %1310 = vmatprep.subr.bf16.mxu0 0
    %1311 = vmatpush1.bf16.msra.mxu0 %v1181
    %1312 = vmatprep.subr.bf16.mxu0 0
    %1313 = vmatpush1.bf16.msra.mxu0 %v1182
    %1314 = vmatprep.subr.bf16.mxu0 0
    %1315 = vmatpush1.bf16.msra.mxu0 %v1183
    %1316 = vmatprep.subr.bf16.mxu0 0
    %1317 = vmatpush1.bf16.msra.mxu0 %v1184
    %1318 = vmatprep.subr.bf16.mxu0 0
    %1319 = vmatpush1.bf16.msra.mxu0 %v1185
    %1320 = vmatprep.subr.bf16.mxu0 0
    %1321 = vmatpush1.bf16.msra.mxu0 %v1186
    %1322 = vmatprep.subr.bf16.mxu0 0
    %1323 = vmatpush1.bf16.msra.mxu0 %v1187
    %1324 = vmatprep.subr.bf16.mxu0 0
    %1325 = vmatpush1.bf16.msra.mxu0 %v1188
    %1326 = vmatprep.subr.bf16.mxu0 0
    %1327 = vmatpush1.bf16.msra.mxu0 %v1189
    %1328 = vmatprep.subr.bf16.mxu0 0
    %1329 = vmatpush1.bf16.msra.mxu0 %v1190
    %1330 = vmatprep.subr.bf16.mxu0 0
    %1331 = vmatpush1.bf16.msra.mxu0 %v1191
    %1332 = vmatprep.subr.bf16.mxu0 0
    %1333 = vmatpush1.bf16.msra.mxu0 %v1192
    %1334 = vmatprep.subr.bf16.mxu0 0
    %1335 = vmatpush1.bf16.msra.mxu0 %v1193
    %1336 = vmatprep.subr.bf16.mxu0 0
    %1337 = vmatpush1.bf16.msra.mxu0 %v1194
    %1338 = vmatprep.subr.bf16.mxu0 0
    %1339 = vmatpush1.bf16.msra.mxu0 %v1195
    %1340 = vmatprep.mubr.bf16.mxu0 %v911
    %1341 = vmatmul.mubr.bf16.gmra.mrb[0].mxu0 %v910
    %v1342 = vpop.f32.mrb[0].mxu0
    %v1343 = vadd.f32 %v922, %v1342
    %v1344 = vpop.f32.mrb[0].mxu0
    %v1345 = vpop.f32.mrb[0].mxu0
    %v1346 = vpop.f32.mrb[0].mxu0
    %1347 = vdwg.mxu0
    %1348 = vmatprep.subr.bf16.mxu0 0
    %1349 = vmatpush1.bf16.msra.mxu0 %v1196
    %1350 = vmatprep.subr.bf16.mxu0 0
    %1351 = vmatpush1.bf16.msra.mxu0 %v1197
    %1352 = vmatprep.subr.bf16.mxu0 0
    %1353 = vmatpush1.bf16.msra.mxu0 %v1198
    %1354 = vmatprep.subr.bf16.mxu0 0
    %1355 = vmatpush1.bf16.msra.mxu0 %v1199
    %1356 = vmatprep.subr.bf16.mxu0 0
    %1357 = vmatpush1.bf16.msra.mxu0 %v1200
    %1358 = vmatprep.subr.bf16.mxu0 0
    %1359 = vmatpush1.bf16.msra.mxu0 %v1201
    %1360 = vmatprep.subr.bf16.mxu0 0
    %1361 = vmatpush1.bf16.msra.mxu0 %v1202
    %1362 = vmatprep.subr.bf16.mxu0 0
    %1363 = vmatpush1.bf16.msra.mxu0 %v1203
    %1364 = vmatprep.subr.bf16.mxu0 0
    %1365 = vmatpush1.bf16.msra.mxu0 %v1204
    %1366 = vmatprep.subr.bf16.mxu0 0
    %1367 = vmatpush1.bf16.msra.mxu0 %v1205
    %1368 = vmatprep.subr.bf16.mxu0 0
    %1369 = vmatpush1.bf16.msra.mxu0 %v1206
    %1370 = vmatprep.subr.bf16.mxu0 0
    %1371 = vmatpush1.bf16.msra.mxu0 %v1207
    %1372 = vmatprep.subr.bf16.mxu0 0
    %1373 = vmatpush1.bf16.msra.mxu0 %v1208
    %1374 = vmatprep.subr.bf16.mxu0 0
    %1375 = vmatpush1.bf16.msra.mxu0 %v1209
    %1376 = vmatprep.subr.bf16.mxu0 0
    %1377 = vmatpush1.bf16.msra.mxu0 %v1210
    %1378 = vmatprep.subr.bf16.mxu0 0
    %1379 = vmatpush1.bf16.msra.mxu0 %v1211
    %1380 = vmatprep.mubr.bf16.mxu0 %v913
    %1381 = vmatmul.mubr.bf16.gmra.mrb[0].mxu0 %v912
    %v1382 = vpop.f32.mrb[0].mxu0
    %v1383 = vadd.f32 %v1343, %v1382
    %v1384 = vpop.f32.mrb[0].mxu0
    %v1385 = vpop.f32.mrb[0].mxu0
    %v1386 = vpop.f32.mrb[0].mxu0
    %1387 = vdwg.mxu0
    %1388 = vmatprep.subr.bf16.mxu0 0
    %1389 = vmatpush1.bf16.msra.mxu0 %v1212
    %1390 = vmatprep.subr.bf16.mxu0 0
    %1391 = vmatpush1.bf16.msra.mxu0 %v1213
    %1392 = vmatprep.subr.bf16.mxu0 0
    %1393 = vmatpush1.bf16.msra.mxu0 %v1214
    %1394 = vmatprep.subr.bf16.mxu0 0
    %1395 = vmatpush1.bf16.msra.mxu0 %v1215
    %1396 = vmatprep.subr.bf16.mxu0 0
    %1397 = vmatpush1.bf16.msra.mxu0 %v1216
    %1398 = vmatprep.subr.bf16.mxu0 0
    %1399 = vmatpush1.bf16.msra.mxu0 %v1217
    %1400 = vmatprep.subr.bf16.mxu0 0
    %1401 = vmatpush1.bf16.msra.mxu0 %v1218
    %1402 = vmatprep.subr.bf16.mxu0 0
    %1403 = vmatpush1.bf16.msra.mxu0 %v1219
    %1404 = vmatprep.subr.bf16.mxu0 0
    %1405 = vmatpush1.bf16.msra.mxu0 %v1220
    %1406 = vmatprep.subr.bf16.mxu0 0
    %1407 = vmatpush1.bf16.msra.mxu0 %v1221
    %1408 = vmatprep.subr.bf16.mxu0 0
    %1409 = vmatpush1.bf16.msra.mxu0 %v1222
    %1410 = vmatprep.subr.bf16.mxu0 0
    %1411 = vmatpush1.bf16.msra.mxu0 %v1223
    %1412 = vmatprep.subr.bf16.mxu0 0
    %1413 = vmatpush1.bf16.msra.mxu0 %v1224
    %1414 = vmatprep.subr.bf16.mxu0 0
    %1415 = vmatpush1.bf16.msra.mxu0 %v1225
    %1416 = vmatprep.subr.bf16.mxu0 0
    %1417 = vmatpush1.bf16.msra.mxu0 %v1226
    %1418 = vmatprep.subr.bf16.mxu0 0
    %1419 = vmatpush1.bf16.msra.mxu0 %v1227
    %1420 = vmatprep.mubr.bf16.mxu0 %v915
    %1421 = vmatmul.mubr.bf16.gmra.mrb[0].mxu0 %v914
    %v1422 = vpop.f32.mrb[0].mxu0
    %v1423 = vadd.f32 %v1383, %v1422
    %v1424 = vpop.f32.mrb[0].mxu0
    %v1425 = vpop.f32.mrb[0].mxu0
    %v1426 = vpop.f32.mrb[0].mxu0
    %1427 = vdwg.mxu0
    %1428 = vmatprep.subr.bf16.mxu0 0
    %1429 = vmatpush1.bf16.msra.mxu0 %v1228
    %1430 = vmatprep.subr.bf16.mxu0 0
    %1431 = vmatpush1.bf16.msra.mxu0 %v1229
    %1432 = vmatprep.subr.bf16.mxu0 0
    %1433 = vmatpush1.bf16.msra.mxu0 %v1230
    %1434 = vmatprep.subr.bf16.mxu0 0
    %1435 = vmatpush1.bf16.msra.mxu0 %v1231
    %1436 = vmatprep.subr.bf16.mxu0 0
    %1437 = vmatpush1.bf16.msra.mxu0 %v1232
    %1438 = vmatprep.subr.bf16.mxu0 0
    %1439 = vmatpush1.bf16.msra.mxu0 %v1233
    %1440 = vmatprep.subr.bf16.mxu0 0
    %1441 = vmatpush1.bf16.msra.mxu0 %v1234
    %1442 = vmatprep.subr.bf16.mxu0 0
    %1443 = vmatpush1.bf16.msra.mxu0 %v1235
    %1444 = vmatprep.subr.bf16.mxu0 0
    %1445 = vmatpush1.bf16.msra.mxu0 %v1236
    %1446 = vmatprep.subr.bf16.mxu0 0
    %1447 = vmatpush1.bf16.msra.mxu0 %v1237
    %1448 = vmatprep.subr.bf16.mxu0 0
    %1449 = vmatpush1.bf16.msra.mxu0 %v1238
    %1450 = vmatprep.subr.bf16.mxu0 0
    %1451 = vmatpush1.bf16.msra.mxu0 %v1239
    %1452 = vmatprep.subr.bf16.mxu0 0
    %1453 = vmatpush1.bf16.msra.mxu0 %v1240
    %1454 = vmatprep.subr.bf16.mxu0 0
    %1455 = vmatpush1.bf16.msra.mxu0 %v1241
    %1456 = vmatprep.subr.bf16.mxu0 0
    %1457 = vmatpush1.bf16.msra.mxu0 %v1242
    %1458 = vmatprep.subr.bf16.mxu0 0
    %1459 = vmatpush1.bf16.msra.mxu0 %v1243
    %1460 = vmatprep.mubr.bf16.mxu0 %v917
    %1461 = vmatmul.mubr.bf16.gmra.mrb[0].mxu0 %v916
    %v1462 = vpop.f32.mrb[0].mxu0
    %v1463 = vadd.f32 %v1423, %v1462
    %v1464 = vpop.f32.mrb[0].mxu0
    %v1465 = vpop.f32.mrb[0].mxu0
    %v1466 = vpop.f32.mrb[0].mxu0
    %1467 = vdwg.mxu0
    %v1468 = vmax.f32 %v1463, 0.0
    %v1469 = vpack.c.bf16 %v1468, %v1468
    %v1471 = vlaneseq
    %v1472 = vshrl.u32 %v1471, 7
    %v1473 = vsub.s32 0, %v1472
    %v1474 = vrot.slane %v373, %v1473
    %v1475 = vlaneseq
    %v1476 = vshrl.u32 %v1475, 7
    %v1477 = vsub.s32 1, %v1476
    %v1478 = vrot.slane %v373, %v1477
    %v1479 = vlaneseq
    %v1480 = vshrl.u32 %v1479, 7
    %v1481 = vsub.s32 2, %v1480
    %v1482 = vrot.slane %v373, %v1481
    %v1483 = vlaneseq
    %v1484 = vshrl.u32 %v1483, 7
    %v1485 = vsub.s32 3, %v1484
    %v1486 = vrot.slane %v373, %v1485
    %v1487 = vlaneseq
    %v1488 = vshrl.u32 %v1487, 7
    %v1489 = vsub.s32 4, %v1488
    %v1490 = vrot.slane %v373, %v1489
    %v1491 = vlaneseq
    %v1492 = vshrl.u32 %v1491, 7
    %v1493 = vsub.s32 5, %v1492
    %v1494 = vrot.slane %v373, %v1493
    %v1495 = vlaneseq
    %v1496 = vshrl.u32 %v1495, 7
    %v1497 = vsub.s32 6, %v1496
    %v1498 = vrot.slane %v373, %v1497
    %v1499 = vlaneseq
    %v1500 = vshrl.u32 %v1499, 7
    %v1501 = vsub.s32 7, %v1500
    %v1502 = vrot.slane %v373, %v1501
    %v1515 = vunpack.c.l.b16 %v239
    %v1516 = vunpack.c.h.b16 %v239
    %v1517 = vunpack.c.l.b16 %v240
    %v1518 = vunpack.c.h.b16 %v240
    %v1519 = vunpack.c.l.b16 %v241
    %v1520 = vunpack.c.h.b16 %v241
    %v1521 = vunpack.c.l.b16 %v242
    %v1522 = vunpack.c.h.b16 %v242
    %v1523 = vpack.c.b16 %v1515, %v1515
    %v1524 = vpack.c.b16 %v1516, %v1516
    %v1525 = vpack.c.b16 %v1517, %v1517
    %v1526 = vpack.c.b16 %v1518, %v1518
    %v1527 = vpack.c.b16 %v1519, %v1519
    %v1528 = vpack.c.b16 %v1520, %v1520
    %v1529 = vpack.c.b16 %v1521, %v1521
    %v1530 = vpack.c.b16 %v1522, %v1522
    %vm1531 = vcmask 64512
    %v1533 = vsel %vm1531, %v1469, 0
    %vm1535 = vcmask 1043456
    %v1537 = vsel %vm1535, %v1523, 0
    %v1540 = vsel %vm1535, %v1524, 0
    %v1543 = vsel %vm1535, %v1525, 0
    %v1546 = vsel %vm1535, %v1526, 0
    %v1549 = vsel %vm1535, %v1527, 0
    %v1552 = vsel %vm1535, %v1528, 0
    %v1555 = vsel %vm1535, %v1529, 0
    %v1558 = vsel %vm1535, %v1530, 0
    %1560 = vmatprep.subr.bf16.mxu0 %v1540
    %1561 = vmatpush1.bf16.msra.mxu0 %v1537
    %1562 = vmatprep.subr.bf16.mxu0 0
    %1563 = vmatpush1.bf16.msra.mxu0 0
    %1564 = vmatprep.subr.bf16.mxu0 0
    %1565 = vmatpush1.bf16.msra.mxu0 0
    %1566 = vmatprep.subr.bf16.mxu0 0
    %1567 = vmatpush1.bf16.msra.mxu0 0
    %1568 = vmatprep.subr.bf16.mxu0 0
    %1569 = vmatpush1.bf16.msra.mxu0 0
    %1570 = vmatprep.subr.bf16.mxu0 0
    %1571 = vmatpush1.bf16.msra.mxu0 0
    %1572 = vmatprep.subr.bf16.mxu0 0
    %1573 = vmatpush1.bf16.msra.mxu0 0
    %1574 = vmatprep.subr.bf16.mxu0 0
    %1575 = vmatpush1.bf16.msra.mxu0 0
    %1576 = vmatprep.subr.bf16.mxu0 0
    %1577 = vmatpush1.bf16.msra.mxu0 0
    %1578 = vmatprep.subr.bf16.mxu0 0
    %1579 = vmatpush1.bf16.msra.mxu0 0
    %1580 = vmatprep.subr.bf16.mxu0 0
    %1581 = vmatpush1.bf16.msra.mxu0 0
    %1582 = vmatprep.subr.bf16.mxu0 0
    %1583 = vmatpush1.bf16.msra.mxu0 0
    %1584 = vmatprep.subr.bf16.mxu0 0
    %1585 = vmatpush1.bf16.msra.mxu0 0
    %1586 = vmatprep.subr.bf16.mxu0 0
    %1587 = vmatpush1.bf16.msra.mxu0 0
    %1588 = vmatprep.subr.bf16.mxu0 0
    %1589 = vmatpush1.bf16.msra.mxu0 0
    %1590 = vmatprep.subr.bf16.mxu0 0
    %1591 = vmatpush1.bf16.msra.mxu0 0
    %1592 = vmatprep.mubr.bf16.mxu0 0
    %1593 = vmatmul.mubr.bf16.gmra.mrb[0].mxu0 %v1533
    %v1594 = vpop.f32.mrb[0].mxu0
    %v1595 = vadd.f32 %v1474, %v1594
    %v1596 = vpop.f32.mrb[0].mxu0
    %v1597 = vadd.f32 %v1478, %v1596
    %v1598 = vpop.f32.mrb[0].mxu0
    %v1599 = vpop.f32.mrb[0].mxu0
    %1600 = vdwg.mxu0
    %1601 = vmatprep.subr.bf16.mxu0 %v1546
    %1602 = vmatpush1.bf16.msra.mxu0 %v1543
    %1603 = vmatprep.subr.bf16.mxu0 0
    %1604 = vmatpush1.bf16.msra.mxu0 0
    %1605 = vmatprep.subr.bf16.mxu0 0
    %1606 = vmatpush1.bf16.msra.mxu0 0
    %1607 = vmatprep.subr.bf16.mxu0 0
    %1608 = vmatpush1.bf16.msra.mxu0 0
    %1609 = vmatprep.subr.bf16.mxu0 0
    %1610 = vmatpush1.bf16.msra.mxu0 0
    %1611 = vmatprep.subr.bf16.mxu0 0
    %1612 = vmatpush1.bf16.msra.mxu0 0
    %1613 = vmatprep.subr.bf16.mxu0 0
    %1614 = vmatpush1.bf16.msra.mxu0 0
    %1615 = vmatprep.subr.bf16.mxu0 0
    %1616 = vmatpush1.bf16.msra.mxu0 0
    %1617 = vmatprep.subr.bf16.mxu0 0
    %1618 = vmatpush1.bf16.msra.mxu0 0
    %1619 = vmatprep.subr.bf16.mxu0 0
    %1620 = vmatpush1.bf16.msra.mxu0 0
    %1621 = vmatprep.subr.bf16.mxu0 0
    %1622 = vmatpush1.bf16.msra.mxu0 0
    %1623 = vmatprep.subr.bf16.mxu0 0
    %1624 = vmatpush1.bf16.msra.mxu0 0
    %1625 = vmatprep.subr.bf16.mxu0 0
    %1626 = vmatpush1.bf16.msra.mxu0 0
    %1627 = vmatprep.subr.bf16.mxu0 0
    %1628 = vmatpush1.bf16.msra.mxu0 0
    %1629 = vmatprep.subr.bf16.mxu0 0
    %1630 = vmatpush1.bf16.msra.mxu0 0
    %1631 = vmatprep.subr.bf16.mxu0 0
    %1632 = vmatpush1.bf16.msra.mxu0 0
    %1633 = vmatprep.mubr.bf16.mxu0 0
    %1634 = vmatmul.mubr.bf16.gmra.mrb[0].mxu0 %v1533
    %v1635 = vpop.f32.mrb[0].mxu0
    %v1636 = vadd.f32 %v1482, %v1635
    %v1637 = vpop.f32.mrb[0].mxu0
    %v1638 = vadd.f32 %v1486, %v1637
    %v1639 = vpop.f32.mrb[0].mxu0
    %v1640 = vpop.f32.mrb[0].mxu0
    %1641 = vdwg.mxu0
    %1642 = vmatprep.subr.bf16.mxu0 %v1552
    %1643 = vmatpush1.bf16.msra.mxu0 %v1549
    %1644 = vmatprep.subr.bf16.mxu0 0
    %1645 = vmatpush1.bf16.msra.mxu0 0
    %1646 = vmatprep.subr.bf16.mxu0 0
    %1647 = vmatpush1.bf16.msra.mxu0 0
    %1648 = vmatprep.subr.bf16.mxu0 0
    %1649 = vmatpush1.bf16.msra.mxu0 0
    %1650 = vmatprep.subr.bf16.mxu0 0
    %1651 = vmatpush1.bf16.msra.mxu0 0
    %1652 = vmatprep.subr.bf16.mxu0 0
    %1653 = vmatpush1.bf16.msra.mxu0 0
    %1654 = vmatprep.subr.bf16.mxu0 0
    %1655 = vmatpush1.bf16.msra.mxu0 0
    %1656 = vmatprep.subr.bf16.mxu0 0
    %1657 = vmatpush1.bf16.msra.mxu0 0
    %1658 = vmatprep.subr.bf16.mxu0 0
    %1659 = vmatpush1.bf16.msra.mxu0 0
    %1660 = vmatprep.subr.bf16.mxu0 0
    %1661 = vmatpush1.bf16.msra.mxu0 0
    %1662 = vmatprep.subr.bf16.mxu0 0
    %1663 = vmatpush1.bf16.msra.mxu0 0
    %1664 = vmatprep.subr.bf16.mxu0 0
    %1665 = vmatpush1.bf16.msra.mxu0 0
    %1666 = vmatprep.subr.bf16.mxu0 0
    %1667 = vmatpush1.bf16.msra.mxu0 0
    %1668 = vmatprep.subr.bf16.mxu0 0
    %1669 = vmatpush1.bf16.msra.mxu0 0
    %1670 = vmatprep.subr.bf16.mxu0 0
    %1671 = vmatpush1.bf16.msra.mxu0 0
    %1672 = vmatprep.subr.bf16.mxu0 0
    %1673 = vmatpush1.bf16.msra.mxu0 0
    %1674 = vmatprep.mubr.bf16.mxu0 0
    %1675 = vmatmul.mubr.bf16.gmra.mrb[0].mxu0 %v1533
    %v1676 = vpop.f32.mrb[0].mxu0
    %v1677 = vadd.f32 %v1490, %v1676
    %v1678 = vpop.f32.mrb[0].mxu0
    %v1679 = vadd.f32 %v1494, %v1678
    %v1680 = vpop.f32.mrb[0].mxu0
    %v1681 = vpop.f32.mrb[0].mxu0
    %1682 = vdwg.mxu0
    %1683 = vmatprep.subr.bf16.mxu0 %v1558
    %1684 = vmatpush1.bf16.msra.mxu0 %v1555
    %1685 = vmatprep.subr.bf16.mxu0 0
    %1686 = vmatpush1.bf16.msra.mxu0 0
    %1687 = vmatprep.subr.bf16.mxu0 0
    %1688 = vmatpush1.bf16.msra.mxu0 0
    %1689 = vmatprep.subr.bf16.mxu0 0
    %1690 = vmatpush1.bf16.msra.mxu0 0
    %1691 = vmatprep.subr.bf16.mxu0 0
    %1692 = vmatpush1.bf16.msra.mxu0 0
    %1693 = vmatprep.subr.bf16.mxu0 0
    %1694 = vmatpush1.bf16.msra.mxu0 0
    %1695 = vmatprep.subr.bf16.mxu0 0
    %1696 = vmatpush1.bf16.msra.mxu0 0
    %1697 = vmatprep.subr.bf16.mxu0 0
    %1698 = vmatpush1.bf16.msra.mxu0 0
    %1699 = vmatprep.subr.bf16.mxu0 0
    %1700 = vmatpush1.bf16.msra.mxu0 0
    %1701 = vmatprep.subr.bf16.mxu0 0
    %1702 = vmatpush1.bf16.msra.mxu0 0
    %1703 = vmatprep.subr.bf16.mxu0 0
    %1704 = vmatpush1.bf16.msra.mxu0 0
    %1705 = vmatprep.subr.bf16.mxu0 0
    %1706 = vmatpush1.bf16.msra.mxu0 0
    %1707 = vmatprep.subr.bf16.mxu0 0
    %1708 = vmatpush1.bf16.msra.mxu0 0
    %1709 = vmatprep.subr.bf16.mxu0 0
    %1710 = vmatpush1.bf16.msra.mxu0 0
    %1711 = vmatprep.subr.bf16.mxu0 0
    %1712 = vmatpush1.bf16.msra.mxu0 0
    %1713 = vmatprep.subr.bf16.mxu0 0
    %1714 = vmatpush1.bf16.msra.mxu0 0
    %1715 = vmatprep.mubr.bf16.mxu0 0
    %1716 = vmatmul.mubr.bf16.gmra.mrb[0].mxu0 %v1533
    %v1717 = vpop.f32.mrb[0].mxu0
    %v1718 = vadd.f32 %v1498, %v1717
    %v1719 = vpop.f32.mrb[0].mxu0
    %v1720 = vadd.f32 %v1502, %v1719
    %v1721 = vpop.f32.mrb[0].mxu0
    %v1722 = vpop.f32.mrb[0].mxu0
    %1723 = vdwg.mxu0
    %v1724 = vmax.f32 %v1595, 0.0
    %v1725 = vmax.f32 %v1597, 0.0
    %v1726 = vmax.f32 %v1636, 0.0
    %v1727 = vmax.f32 %v1638, 0.0
    %v1728 = vmax.f32 %v1677, 0.0
    %v1729 = vmax.f32 %v1679, 0.0
    %v1730 = vmax.f32 %v1718, 0.0
    %v1731 = vmax.f32 %v1720, 0.0
    %v1732 = vpack.c.bf16 %v1724, %v1724
    %v1733 = vpack.c.bf16 %v1725, %v1725
    %v1734 = vpack.c.bf16 %v1726, %v1726
    %v1735 = vpack.c.bf16 %v1727, %v1727
    %v1736 = vpack.c.bf16 %v1728, %v1728
    %v1737 = vpack.c.bf16 %v1729, %v1729
    %v1738 = vpack.c.bf16 %v1730, %v1730
    %v1739 = vpack.c.bf16 %v1731, %v1731
    %v1741 = vlaneseq
    %v1742 = vshrl.u32 %v1741, 7
    %v1743 = vsub.s32 0, %v1742
    %v1744 = vrot.slane %v374, %v1743
    %v1874 = vunpack.c.l.b16 %v243
    %v1875 = vunpack.c.l.b16 %v244
    %v1876 = vunpack.c.l.b16 %v245
    %v1877 = vunpack.c.l.b16 %v246
    %v1878 = vunpack.c.l.b16 %v247
    %v1879 = vunpack.c.l.b16 %v248
    %v1880 = vunpack.c.l.b16 %v249
    %v1881 = vunpack.c.l.b16 %v250
    %v1882 = vunpack.c.l.b16 %v251
    %v1883 = vunpack.c.l.b16 %v252
    %v1884 = vunpack.c.l.b16 %v253
    %v1885 = vunpack.c.l.b16 %v254
    %v1886 = vunpack.c.l.b16 %v255
    %v1887 = vunpack.c.l.b16 %v256
    %v1888 = vunpack.c.l.b16 %v257
    %v1889 = vunpack.c.l.b16 %v258
    %v1890 = vunpack.c.l.b16 %v259
    %v1891 = vunpack.c.l.b16 %v260
    %v1892 = vunpack.c.l.b16 %v261
    %v1893 = vunpack.c.l.b16 %v262
    %v1894 = vunpack.c.l.b16 %v263
    %v1895 = vunpack.c.l.b16 %v264
    %v1896 = vunpack.c.l.b16 %v265
    %v1897 = vunpack.c.l.b16 %v266
    %v1898 = vunpack.c.l.b16 %v267
    %v1899 = vunpack.c.l.b16 %v268
    %v1900 = vunpack.c.l.b16 %v269
    %v1901 = vunpack.c.l.b16 %v270
    %v1902 = vunpack.c.l.b16 %v271
    %v1903 = vunpack.c.l.b16 %v272
    %v1904 = vunpack.c.l.b16 %v273
    %v1905 = vunpack.c.l.b16 %v274
    %v1906 = vunpack.c.l.b16 %v275
    %v1907 = vunpack.c.l.b16 %v276
    %v1908 = vunpack.c.l.b16 %v277
    %v1909 = vunpack.c.l.b16 %v278
    %v1910 = vunpack.c.l.b16 %v279
    %v1911 = vunpack.c.l.b16 %v280
    %v1912 = vunpack.c.l.b16 %v281
    %v1913 = vunpack.c.l.b16 %v282
    %v1914 = vunpack.c.l.b16 %v283
    %v1915 = vunpack.c.l.b16 %v284
    %v1916 = vunpack.c.l.b16 %v285
    %v1917 = vunpack.c.l.b16 %v286
    %v1918 = vunpack.c.l.b16 %v287
    %v1919 = vunpack.c.l.b16 %v288
    %v1920 = vunpack.c.l.b16 %v289
    %v1921 = vunpack.c.l.b16 %v290
    %v1922 = vunpack.c.l.b16 %v291
    %v1923 = vunpack.c.l.b16 %v292
    %v1924 = vunpack.c.l.b16 %v293
    %v1925 = vunpack.c.l.b16 %v294
    %v1926 = vunpack.c.l.b16 %v295
    %v1927 = vunpack.c.l.b16 %v296
    %v1928 = vunpack.c.l.b16 %v297
    %v1929 = vunpack.c.l.b16 %v298
    %v1930 = vunpack.c.l.b16 %v299
    %v1931 = vunpack.c.l.b16 %v300
    %v1932 = vunpack.c.l.b16 %v301
    %v1933 = vunpack.c.l.b16 %v302
    %v1934 = vunpack.c.l.b16 %v303
    %v1935 = vunpack.c.l.b16 %v304
    %v1936 = vunpack.c.l.b16 %v305
    %v1937 = vunpack.c.l.b16 %v306
    %v1938 = vunpack.c.l.b16 %v307
    %v1939 = vunpack.c.l.b16 %v308
    %v1940 = vunpack.c.l.b16 %v309
    %v1941 = vunpack.c.l.b16 %v310
    %v1942 = vunpack.c.l.b16 %v311
    %v1943 = vunpack.c.l.b16 %v312
    %v1944 = vunpack.c.l.b16 %v313
    %v1945 = vunpack.c.l.b16 %v314
    %v1946 = vunpack.c.l.b16 %v315
    %v1947 = vunpack.c.l.b16 %v316
    %v1948 = vunpack.c.l.b16 %v317
    %v1949 = vunpack.c.l.b16 %v318
    %v1950 = vunpack.c.l.b16 %v319
    %v1951 = vunpack.c.l.b16 %v320
    %v1952 = vunpack.c.l.b16 %v321
    %v1953 = vunpack.c.l.b16 %v322
    %v1954 = vunpack.c.l.b16 %v323
    %v1955 = vunpack.c.l.b16 %v324
    %v1956 = vunpack.c.l.b16 %v325
    %v1957 = vunpack.c.l.b16 %v326
    %v1958 = vunpack.c.l.b16 %v327
    %v1959 = vunpack.c.l.b16 %v328
    %v1960 = vunpack.c.l.b16 %v329
    %v1961 = vunpack.c.l.b16 %v330
    %v1962 = vunpack.c.l.b16 %v331
    %v1963 = vunpack.c.l.b16 %v332
    %v1964 = vunpack.c.l.b16 %v333
    %v1965 = vunpack.c.l.b16 %v334
    %v1966 = vunpack.c.l.b16 %v335
    %v1967 = vunpack.c.l.b16 %v336
    %v1968 = vunpack.c.l.b16 %v337
    %v1969 = vunpack.c.l.b16 %v338
    %v1970 = vunpack.c.l.b16 %v339
    %v1971 = vunpack.c.l.b16 %v340
    %v1972 = vunpack.c.l.b16 %v341
    %v1973 = vunpack.c.l.b16 %v342
    %v1974 = vunpack.c.l.b16 %v343
    %v1975 = vunpack.c.l.b16 %v344
    %v1976 = vunpack.c.l.b16 %v345
    %v1977 = vunpack.c.l.b16 %v346
    %v1978 = vunpack.c.l.b16 %v347
    %v1979 = vunpack.c.l.b16 %v348
    %v1980 = vunpack.c.l.b16 %v349
    %v1981 = vunpack.c.l.b16 %v350
    %v1982 = vunpack.c.l.b16 %v351
    %v1983 = vunpack.c.l.b16 %v352
    %v1984 = vunpack.c.l.b16 %v353
    %v1985 = vunpack.c.l.b16 %v354
    %v1986 = vunpack.c.l.b16 %v355
    %v1987 = vunpack.c.l.b16 %v356
    %v1988 = vunpack.c.l.b16 %v357
    %v1989 = vunpack.c.l.b16 %v358
    %v1990 = vunpack.c.l.b16 %v359
    %v1991 = vunpack.c.l.b16 %v360
    %v1992 = vunpack.c.l.b16 %v361
    %v1993 = vunpack.c.l.b16 %v362
    %v1994 = vunpack.c.l.b16 %v363
    %v1995 = vunpack.c.l.b16 %v364
    %v1996 = vunpack.c.l.b16 %v365
    %v1997 = vunpack.c.l.b16 %v366
    %v1998 = vunpack.c.l.b16 %v367
    %v1999 = vunpack.c.l.b16 %v368
    %v2000 = vunpack.c.l.b16 %v369
    %v2001 = vunpack.c.l.b16 %v370
    %v2002 = vpack.c.b16 %v1875, %v1874
    %v2003 = vpack.c.b16 %v1877, %v1876
    %v2004 = vpack.c.b16 %v1879, %v1878
    %v2005 = vpack.c.b16 %v1881, %v1880
    %v2006 = vpack.c.b16 %v1883, %v1882
    %v2007 = vpack.c.b16 %v1885, %v1884
    %v2008 = vpack.c.b16 %v1887, %v1886
    %v2009 = vpack.c.b16 %v1889, %v1888
    %v2010 = vpack.c.b16 %v1891, %v1890
    %v2011 = vpack.c.b16 %v1893, %v1892
    %v2012 = vpack.c.b16 %v1895, %v1894
    %v2013 = vpack.c.b16 %v1897, %v1896
    %v2014 = vpack.c.b16 %v1899, %v1898
    %v2015 = vpack.c.b16 %v1901, %v1900
    %v2016 = vpack.c.b16 %v1903, %v1902
    %v2017 = vpack.c.b16 %v1905, %v1904
    %v2018 = vpack.c.b16 %v1907, %v1906
    %v2019 = vpack.c.b16 %v1909, %v1908
    %v2020 = vpack.c.b16 %v1911, %v1910
    %v2021 = vpack.c.b16 %v1913, %v1912
    %v2022 = vpack.c.b16 %v1915, %v1914
    %v2023 = vpack.c.b16 %v1917, %v1916
    %v2024 = vpack.c.b16 %v1919, %v1918
    %v2025 = vpack.c.b16 %v1921, %v1920
    %v2026 = vpack.c.b16 %v1923, %v1922
    %v2027 = vpack.c.b16 %v1925, %v1924
    %v2028 = vpack.c.b16 %v1927, %v1926
    %v2029 = vpack.c.b16 %v1929, %v1928
    %v2030 = vpack.c.b16 %v1931, %v1930
    %v2031 = vpack.c.b16 %v1933, %v1932
    %v2032 = vpack.c.b16 %v1935, %v1934
    %v2033 = vpack.c.b16 %v1937, %v1936
    %v2034 = vpack.c.b16 %v1939, %v1938
    %v2035 = vpack.c.b16 %v1941, %v1940
    %v2036 = vpack.c.b16 %v1943, %v1942
    %v2037 = vpack.c.b16 %v1945, %v1944
    %v2038 = vpack.c.b16 %v1947, %v1946
    %v2039 = vpack.c.b16 %v1949, %v1948
    %v2040 = vpack.c.b16 %v1951, %v1950
    %v2041 = vpack.c.b16 %v1953, %v1952
    %v2042 = vpack.c.b16 %v1955, %v1954
    %v2043 = vpack.c.b16 %v1957, %v1956
    %v2044 = vpack.c.b16 %v1959, %v1958
    %v2045 = vpack.c.b16 %v1961, %v1960
    %v2046 = vpack.c.b16 %v1963, %v1962
    %v2047 = vpack.c.b16 %v1965, %v1964
    %v2048 = vpack.c.b16 %v1967, %v1966
    %v2049 = vpack.c.b16 %v1969, %v1968
    %v2050 = vpack.c.b16 %v1971, %v1970
    %v2051 = vpack.c.b16 %v1973, %v1972
    %v2052 = vpack.c.b16 %v1975, %v1974
    %v2053 = vpack.c.b16 %v1977, %v1976
    %v2054 = vpack.c.b16 %v1979, %v1978
    %v2055 = vpack.c.b16 %v1981, %v1980
    %v2056 = vpack.c.b16 %v1983, %v1982
    %v2057 = vpack.c.b16 %v1985, %v1984
    %v2058 = vpack.c.b16 %v1987, %v1986
    %v2059 = vpack.c.b16 %v1989, %v1988
    %v2060 = vpack.c.b16 %v1991, %v1990
    %v2061 = vpack.c.b16 %v1993, %v1992
    %v2062 = vpack.c.b16 %v1995, %v1994
    %v2063 = vpack.c.b16 %v1997, %v1996
    %v2064 = vpack.c.b16 %v1999, %v1998
    %v2065 = vpack.c.b16 %v2001, %v2000
    %2130 = vmatprep.subr.bf16.mxu0 0
    %2131 = vmatpush1.bf16.msra.mxu0 %v2002
    %2132 = vmatprep.subr.bf16.mxu0 0
    %2133 = vmatpush1.bf16.msra.mxu0 %v2003
    %2134 = vmatprep.subr.bf16.mxu0 0
    %2135 = vmatpush1.bf16.msra.mxu0 %v2004
    %2136 = vmatprep.subr.bf16.mxu0 0
    %2137 = vmatpush1.bf16.msra.mxu0 %v2005
    %2138 = vmatprep.subr.bf16.mxu0 0
    %2139 = vmatpush1.bf16.msra.mxu0 %v2006
    %2140 = vmatprep.subr.bf16.mxu0 0
    %2141 = vmatpush1.bf16.msra.mxu0 %v2007
    %2142 = vmatprep.subr.bf16.mxu0 0
    %2143 = vmatpush1.bf16.msra.mxu0 %v2008
    %2144 = vmatprep.subr.bf16.mxu0 0
    %2145 = vmatpush1.bf16.msra.mxu0 %v2009
    %2146 = vmatprep.subr.bf16.mxu0 0
    %2147 = vmatpush1.bf16.msra.mxu0 %v2010
    %2148 = vmatprep.subr.bf16.mxu0 0
    %2149 = vmatpush1.bf16.msra.mxu0 %v2011
    %2150 = vmatprep.subr.bf16.mxu0 0
    %2151 = vmatpush1.bf16.msra.mxu0 %v2012
    %2152 = vmatprep.subr.bf16.mxu0 0
    %2153 = vmatpush1.bf16.msra.mxu0 %v2013
    %2154 = vmatprep.subr.bf16.mxu0 0
    %2155 = vmatpush1.bf16.msra.mxu0 %v2014
    %2156 = vmatprep.subr.bf16.mxu0 0
    %2157 = vmatpush1.bf16.msra.mxu0 %v2015
    %2158 = vmatprep.subr.bf16.mxu0 0
    %2159 = vmatpush1.bf16.msra.mxu0 %v2016
    %2160 = vmatprep.subr.bf16.mxu0 0
    %2161 = vmatpush1.bf16.msra.mxu0 %v2017
    %2162 = vmatprep.mubr.bf16.mxu0 %v1733
    %2163 = vmatmul.mubr.bf16.gmra.mrb[0].mxu0 %v1732
    %v2164 = vpop.f32.mrb[0].mxu0
    %v2165 = vadd.f32 %v1744, %v2164
    %v2166 = vpop.f32.mrb[0].mxu0
    %v2167 = vpop.f32.mrb[0].mxu0
    %v2168 = vpop.f32.mrb[0].mxu0
    %2169 = vdwg.mxu0
    %2170 = vmatprep.subr.bf16.mxu0 0
    %2171 = vmatpush1.bf16.msra.mxu0 %v2018
    %2172 = vmatprep.subr.bf16.mxu0 0
    %2173 = vmatpush1.bf16.msra.mxu0 %v2019
    %2174 = vmatprep.subr.bf16.mxu0 0
    %2175 = vmatpush1.bf16.msra.mxu0 %v2020
    %2176 = vmatprep.subr.bf16.mxu0 0
    %2177 = vmatpush1.bf16.msra.mxu0 %v2021
    %2178 = vmatprep.subr.bf16.mxu0 0
    %2179 = vmatpush1.bf16.msra.mxu0 %v2022
    %2180 = vmatprep.subr.bf16.mxu0 0
    %2181 = vmatpush1.bf16.msra.mxu0 %v2023
    %2182 = vmatprep.subr.bf16.mxu0 0
    %2183 = vmatpush1.bf16.msra.mxu0 %v2024
    %2184 = vmatprep.subr.bf16.mxu0 0
    %2185 = vmatpush1.bf16.msra.mxu0 %v2025
    %2186 = vmatprep.subr.bf16.mxu0 0
    %2187 = vmatpush1.bf16.msra.mxu0 %v2026
    %2188 = vmatprep.subr.bf16.mxu0 0
    %2189 = vmatpush1.bf16.msra.mxu0 %v2027
    %2190 = vmatprep.subr.bf16.mxu0 0
    %2191 = vmatpush1.bf16.msra.mxu0 %v2028
    %2192 = vmatprep.subr.bf16.mxu0 0
    %2193 = vmatpush1.bf16.msra.mxu0 %v2029
    %2194 = vmatprep.subr.bf16.mxu0 0
    %2195 = vmatpush1.bf16.msra.mxu0 %v2030
    %2196 = vmatprep.subr.bf16.mxu0 0
    %2197 = vmatpush1.bf16.msra.mxu0 %v2031
    %2198 = vmatprep.subr.bf16.mxu0 0
    %2199 = vmatpush1.bf16.msra.mxu0 %v2032
    %2200 = vmatprep.subr.bf16.mxu0 0
    %2201 = vmatpush1.bf16.msra.mxu0 %v2033
    %2202 = vmatprep.mubr.bf16.mxu0 %v1735
    %2203 = vmatmul.mubr.bf16.gmra.mrb[0].mxu0 %v1734
    %v2204 = vpop.f32.mrb[0].mxu0
    %v2205 = vadd.f32 %v2165, %v2204
    %v2206 = vpop.f32.mrb[0].mxu0
    %v2207 = vpop.f32.mrb[0].mxu0
    %v2208 = vpop.f32.mrb[0].mxu0
    %2209 = vdwg.mxu0
    %2210 = vmatprep.subr.bf16.mxu0 0
    %2211 = vmatpush1.bf16.msra.mxu0 %v2034
    %2212 = vmatprep.subr.bf16.mxu0 0
    %2213 = vmatpush1.bf16.msra.mxu0 %v2035
    %2214 = vmatprep.subr.bf16.mxu0 0
    %2215 = vmatpush1.bf16.msra.mxu0 %v2036
    %2216 = vmatprep.subr.bf16.mxu0 0
    %2217 = vmatpush1.bf16.msra.mxu0 %v2037
    %2218 = vmatprep.subr.bf16.mxu0 0
    %2219 = vmatpush1.bf16.msra.mxu0 %v2038
    %2220 = vmatprep.subr.bf16.mxu0 0
    %2221 = vmatpush1.bf16.msra.mxu0 %v2039
    %2222 = vmatprep.subr.bf16.mxu0 0
    %2223 = vmatpush1.bf16.msra.mxu0 %v2040
    %2224 = vmatprep.subr.bf16.mxu0 0
    %2225 = vmatpush1.bf16.msra.mxu0 %v2041
    %2226 = vmatprep.subr.bf16.mxu0 0
    %2227 = vmatpush1.bf16.msra.mxu0 %v2042
    %2228 = vmatprep.subr.bf16.mxu0 0
    %2229 = vmatpush1.bf16.msra.mxu0 %v2043
    %2230 = vmatprep.subr.bf16.mxu0 0
    %2231 = vmatpush1.bf16.msra.mxu0 %v2044
    %2232 = vmatprep.subr.bf16.mxu0 0
    %2233 = vmatpush1.bf16.msra.mxu0 %v2045
    %2234 = vmatprep.subr.bf16.mxu0 0
    %2235 = vmatpush1.bf16.msra.mxu0 %v2046
    %2236 = vmatprep.subr.bf16.mxu0 0
    %2237 = vmatpush1.bf16.msra.mxu0 %v2047
    %2238 = vmatprep.subr.bf16.mxu0 0
    %2239 = vmatpush1.bf16.msra.mxu0 %v2048
    %2240 = vmatprep.subr.bf16.mxu0 0
    %2241 = vmatpush1.bf16.msra.mxu0 %v2049
    %2242 = vmatprep.mubr.bf16.mxu0 %v1737
    %2243 = vmatmul.mubr.bf16.gmra.mrb[0].mxu0 %v1736
    %v2244 = vpop.f32.mrb[0].mxu0
    %v2245 = vadd.f32 %v2205, %v2244
    %v2246 = vpop.f32.mrb[0].mxu0
    %v2247 = vpop.f32.mrb[0].mxu0
    %v2248 = vpop.f32.mrb[0].mxu0
    %2249 = vdwg.mxu0
    %2250 = vmatprep.subr.bf16.mxu0 0
    %2251 = vmatpush1.bf16.msra.mxu0 %v2050
    %2252 = vmatprep.subr.bf16.mxu0 0
    %2253 = vmatpush1.bf16.msra.mxu0 %v2051
    %2254 = vmatprep.subr.bf16.mxu0 0
    %2255 = vmatpush1.bf16.msra.mxu0 %v2052
    %2256 = vmatprep.subr.bf16.mxu0 0
    %2257 = vmatpush1.bf16.msra.mxu0 %v2053
    %2258 = vmatprep.subr.bf16.mxu0 0
    %2259 = vmatpush1.bf16.msra.mxu0 %v2054
    %2260 = vmatprep.subr.bf16.mxu0 0
    %2261 = vmatpush1.bf16.msra.mxu0 %v2055
    %2262 = vmatprep.subr.bf16.mxu0 0
    %2263 = vmatpush1.bf16.msra.mxu0 %v2056
    %2264 = vmatprep.subr.bf16.mxu0 0
    %2265 = vmatpush1.bf16.msra.mxu0 %v2057
    %2266 = vmatprep.subr.bf16.mxu0 0
    %2267 = vmatpush1.bf16.msra.mxu0 %v2058
    %2268 = vmatprep.subr.bf16.mxu0 0
    %2269 = vmatpush1.bf16.msra.mxu0 %v2059
    %2270 = vmatprep.subr.bf16.mxu0 0
    %2271 = vmatpush1.bf16.msra.mxu0 %v2060
    %2272 = vmatprep.subr.bf16.mxu0 0
    %2273 = vmatpush1.bf16.msra.mxu0 %v2061
    %2274 = vmatprep.subr.bf16.mxu0 0
    %2275 = vmatpush1.bf16.msra.mxu0 %v2062
    %2276 = vmatprep.subr.bf16.mxu0 0
    %2277 = vmatpush1.bf16.msra.mxu0 %v2063
    %2278 = vmatprep.subr.bf16.mxu0 0
    %2279 = vmatpush1.bf16.msra.mxu0 %v2064
    %2280 = vmatprep.subr.bf16.mxu0 0
    %2281 = vmatpush1.bf16.msra.mxu0 %v2065
    %2282 = vmatprep.mubr.bf16.mxu0 %v1739
    %2283 = vmatmul.mubr.bf16.gmra.mrb[0].mxu0 %v1738
    %v2284 = vpop.f32.mrb[0].mxu0
    %v2285 = vadd.f32 %v2245, %v2284
    %v2286 = vpop.f32.mrb[0].mxu0
    %v2287 = vpop.f32.mrb[0].mxu0
    %v2288 = vpop.f32.mrb[0].mxu0
    %2289 = vdwg.mxu0
    %2290 = vst [vmem:[%s9] sm:$0x3] %v2285
    // Predicated region
    $region42: #{autoencoder_forward.1} parent=1 // pred_check
      _
    $region43: #{autoencoder_forward.1} parent=1 // pred_check_branch
      %2292 = sbr.rel (0) target = $region45
    $region44: #{autoencoder_forward.1} parent=1 // pred_region
      _
    $region45: #{autoencoder_forward.1} parent=1 // pred_fallthru
      _
    // Predicated region
    $region46: #{autoencoder_forward.1} parent=1 // pred_check
      _
    $region47: #{autoencoder_forward.1} parent=1 // pred_check_branch
      %2294 = sbr.rel (0) target = $region49
    $region48: #{autoencoder_forward.1} parent=1 // pred_region
      _
    $region49: #{autoencoder_forward.1} parent=1 // pred_fallthru
      _
    %2295 = vsyncpa [#allocation3], 1

</llo_original>
